<compile_context>
chip_gen: v7x
topology: tpu7x:2x2x1
jax: 0.10.0
libtpu: 0.0.40
codegen_flags: <defaults>
</compile_context>

<pallas_src>
import jax
import jax.numpy as jnp
from jax.experimental import pallas as pl
from jax.experimental.pallas import tpu as pltpu

EPS = 1e-5
K = 5          # kernel_Size = 5 (5x5)
PAD = 2        # padding = (2, 2)
CPAD = 2 * PAD # 4 trailing zero columns kept per stored row


def _round_up(x, m):
    return (x + m - 1) // m * m


def _bn_scale_shift(bn):
    scale = bn['gamma'] * jax.lax.rsqrt(bn['var'] + EPS)
    shift = bn['beta'] - bn['mean'] * scale
    return scale, shift


def _pick_tile_rows(H, Win, max_lanes=4096):
    """Rows per output tile.  Small images: whole image (one tile).  Larger
    images: largest divisor of H whose flattened tile is lane-dense (x128) and
    bounded, so the accumulator / output block stay small on 64 MiB VMEM."""
    if H * Win <= max_lanes:
        return H
    best = H
    for th in range(2, H):
        if H % th == 0 and th * Win <= max_lanes and (th * Win) % 128 == 0:
            best = th
    return best


def _make_conv_kernel(*, Cin_p, H, W, Win, TH, NT, relu, prologue):
    """Fused 5x5 conv (implicit big-K GEMM) with optional BN+ReLU prologue and
    affine(+ReLU) epilogue, operating on the shared flat activation layout."""
    Lt = TH * Win              # flattened output-tile lanes
    KKC = K * K * Cin_p        # contraction depth of the single GEMM

    def kernel(x_ref, w_ref, sc_ref, sh_ref, s1_ref, t1_ref, m_ref,
               o_ref, slab_ref, stage_ref):
        # slab_ref : (Cin_p, (TH+5)*Win) zero-halo input slab (VMEM scratch)
        # stage_ref: (KKC, Lt) 25 taps stacked on the contraction axis (VMEM)
        t = pl.program_id(1)

        # ---- build the spatially padded slab in VMEM (halo = memset zeros) --
        slab_ref[...] = jnp.zeros_like(slab_ref)

        def put(src_start, length, dst_start):
            chunk = x_ref[:, pl.ds(src_start, length)]
            if prologue:   # fused BN1 + ReLU; re-mask the zero columns after it
                chunk = jnp.maximum(chunk * s1_ref[...] + t1_ref[...], 0.0)
                chunk = chunk * m_ref[:, :length]
            slab_ref[:, dst_start:dst_start + length] = chunk

        if NT == 1:
            put(0, H * Win, 2 * Win + 2)
        else:
            r0 = t * TH

            @pl.when(t == 0)
            def _():
                put(0, (TH + 2) * Win, 2 * Win + 2)

            @pl.when(t == NT - 1)
            def _():
                put((r0 - 2) * Win, (TH + 2) * Win, 2)

            if NT > 2:
                @pl.when((t > 0) & (t < NT - 1))
                def _():
                    put((r0 - 2) * Win, (TH + 4) * Win, 2)

        # ---- stack the 25 taps on the contraction axis (one shifted VMEM copy
        #      per tap), then a single MXU GEMM over K*K*Cin_p ----------------
        for dy in range(K):
            for dx in range(K):
                tap = dy * K + dx
                off = dy * Win + dx
                stage_ref[tap * Cin_p:(tap + 1) * Cin_p, :] = \
                    slab_ref[:, off:off + Lt]

        acc = jnp.dot(w_ref[...], stage_ref[...],
                      preferred_element_type=jnp.float32)

        # ---- epilogue: folded bias/BN affine (+ReLU), zero the garbage lanes -
        y = acc * sc_ref[...] + sh_ref[...]
        if relu:
            y = jnp.maximum(y, 0.0)
        o_ref[...] = y * m_ref[:, :Lt]

    return kernel


def conv5x5_fused(x_lay, conv_p, *, H, W, bn_in=None, bn_out=None):
    """Conv2d(5x5, stride=1, pad=2) + bias on the flat activation layout
    (N, Cin_p, H*(W+4)) -> (N, Cout_p, H*(W+4)), with optional fused eval-mode
    BN+ReLU prologue (bn_in) and BN+ReLU epilogue (bn_out)."""
    N, Cin_p, LX = x_lay.shape
    Win = W + CPAD
    assert LX == H * Win
    w, b = conv_p['w'], conv_p['b']
    Cout, Cin = w.shape[0], w.shape[1]
    Cout_p = _round_up(Cout, 8)
    KKC = K * K * Cin_p
    TH = _pick_tile_rows(H, Win)
    NT = H // TH
    Lt = TH * Win
    CML = (TH + 5) * Win

    # ---------------- host-side (tiny) parameter prep ------------------------
    # Lane-dense 2-D weights: w2[co, (dy*K+dx)*Cin_p + ci] = w[co, ci, dy, dx]
    wt = jnp.transpose(w, (0, 2, 3, 1))                      # (Cout, K, K, Cin)
    wt = jnp.pad(wt, ((0, Cout_p - Cout), (0, 0), (0, 0), (0, Cin_p - Cin)))
    w2 = wt.reshape(Cout_p, KKC)
    # Fold the conv bias into the affine epilogue: y = acc*sc + (b*sc + sh)
    if bn_out is not None:
        sc, sh = _bn_scale_shift(bn_out)
        sh = sh + b * sc
    else:
        sc, sh = jnp.ones_like(b), b
    sc = jnp.pad(sc, (0, Cout_p - Cout)).reshape(Cout_p, 1)
    sh = jnp.pad(sh, (0, Cout_p - Cout)).reshape(Cout_p, 1)
    if bn_in is not None:
        s1, t1 = _bn_scale_shift(bn_in)
        s1 = jnp.pad(s1, (0, Cin_p - s1.shape[0])).reshape(Cin_p, 1)
        t1 = jnp.pad(t1, (0, Cin_p - t1.shape[0])).reshape(Cin_p, 1)
    else:
        s1 = jnp.ones((Cin_p, 1), jnp.float32)
        t1 = jnp.zeros((Cin_p, 1), jnp.float32)
    # Column mask: 1 on the W real columns of each Win-wide row, 0 elsewhere.
    cmask = (jnp.arange(CML, dtype=jnp.int32) % Win < W)
    cmask = cmask.astype(jnp.float32).reshape(1, CML)

    kernel = _make_conv_kernel(Cin_p=Cin_p, H=H, W=W, Win=Win, TH=TH, NT=NT,
                               relu=bn_out is not None,
                               prologue=bn_in is not None)

    return pl.pallas_call(
        kernel,
        out_shape=jax.ShapeDtypeStruct((N, Cout_p, H * Win), jnp.float32),
        grid=(N, NT),
        in_specs=[
            pl.BlockSpec((None, Cin_p, LX), lambda n, t: (n, 0, 0)),   # x (resident per image)
            pl.BlockSpec((Cout_p, KKC), lambda n, t: (0, 0)),          # weights (lane-dense 2D)
            pl.BlockSpec((Cout_p, 1), lambda n, t: (0, 0)),            # epilogue scale
            pl.BlockSpec((Cout_p, 1), lambda n, t: (0, 0)),            # epilogue shift (bias folded)
            pl.BlockSpec((Cin_p, 1), lambda n, t: (0, 0)),             # prologue scale (BN1)
            pl.BlockSpec((Cin_p, 1), lambda n, t: (0, 0)),             # prologue shift (BN1)
            pl.BlockSpec((1, CML), lambda n, t: (0, 0)),               # column mask
        ],
        out_specs=pl.BlockSpec((None, Cout_p, Lt), lambda n, t: (n, 0, t)),
        scratch_shapes=[
            pltpu.VMEM((Cin_p, (TH + 5) * Win), jnp.float32),          # zero-halo slab
            pltpu.VMEM((KKC, Lt), jnp.float32),                        # stacked 25-tap operand
        ],
        compiler_params=pltpu.CompilerParams(
            dimension_semantics=("parallel", "parallel"),
            vmem_limit_bytes=32 * 1024 * 1024),
    )(x_lay, w2, sc, sh, s1, t1, cmask)


# -------------------------------- inconv forward -----------------------------

def inconv_fwd(p, x):
    """inconv forward: BN -> ReLU -> Conv5x5 -> BN -> ReLU -> Conv5x5."""
    N, Cin, H, W = x.shape
    Cout = p['conv1']['w'].shape[0]
    Cin_p = _round_up(Cin, 8)
    Cout_p = _round_up(Cout, 8)
    Win = W + CPAD
    # Single layout pass on the raw input: pad channels to x8 and append 4 zero
    # columns per row (the in-kernel halo builder relies on them).  The
    # activation stays in this layout until the final crop.
    x_lay = jnp.pad(x, ((0, 0), (0, Cin_p - Cin), (0, 0), (0, CPAD)))
    x_lay = x_lay.reshape(N, Cin_p, H * Win)

    h = conv5x5_fused(x_lay, p['conv1'], H=H, W=W,
                      bn_in=p['bn1'], bn_out=p['bn2'])  # BN1+ReLU+conv1+bias+BN2+ReLU
    y = conv5x5_fused(h, p['conv2'], H=H, W=W)          # conv2 + bias
    return y.reshape(N, Cout_p, H, Win)[:, :Cout, :, :W]


# -------------------------------- parameter init -----------------------------

def init_conv(key, in_ch, out_ch):
    k1, k2 = jax.random.split(key)
    bound = 1.0 / jnp.sqrt(in_ch * K * K)
    return {'w': jax.random.uniform(k1, (out_ch, in_ch, K, K), jnp.float32, -bound, bound),
            'b': jax.random.uniform(k2, (out_ch,), jnp.float32, -bound, bound)}


def init_bn(key, c):
    k1, k2, k3, k4 = jax.random.split(key, 4)
    return {'gamma': 1.0 + 0.1 * jax.random.normal(k1, (c,), jnp.float32),
            'beta': 0.05 * jax.random.normal(k2, (c,), jnp.float32),
            'mean': 0.1 * jax.random.normal(k3, (c,), jnp.float32),
            'var': 1.0 + 0.2 * jnp.abs(jax.random.normal(k4, (c,), jnp.float32))}


def init_inconv(key, in_ch, out_ch):
    ks = jax.random.split(key, 4)
    return {'bn1': init_bn(ks[0], in_ch),
            'conv1': init_conv(ks[1], in_ch, out_ch),
            'bn2': init_bn(ks[2], out_ch),
            'conv2': init_conv(ks[3], out_ch, out_ch)}


# --------------------------------- reference ----------------------------------

def _ref_bn_relu(x, bn):
    s, t = _bn_scale_shift(bn)
    return jnp.maximum(x * s[None, :, None, None] + t[None, :, None, None], 0.0)


def _ref_conv(x, p):
    y = jax.lax.conv_general_dilated(
        x, p['w'], window_strides=(1, 1), padding=((PAD, PAD), (PAD, PAD)),
        dimension_numbers=('NCHW', 'OIHW', 'NCHW'),
        precision=jax.lax.Precision.HIGHEST)
    return y + p['b'][None, :, None, None]


def inconv_ref(p, x):
    h = _ref_bn_relu(x, p['bn1'])
    h = _ref_conv(h, p['conv1'])
    h = _ref_bn_relu(h, p['bn2'])
    h = _ref_conv(h, p['conv2'])
    return h


if __name__ == "__main__":
    key = jax.random.PRNGKey(0)
    pkey, xkey = jax.random.split(key)
    in_ch, out_ch = 4, 8
    params = init_inconv(pkey, in_ch, out_ch)
    x = jax.random.normal(xkey, (2, in_ch, 16, 16), jnp.float32)

    fwd = jax.jit(inconv_fwd)
    y = fwd(params, x)
    jax.block_until_ready(y)

    assert y.shape == (2, out_ch, 16, 16), y.shape
    assert bool(jnp.all(jnp.isfinite(y)))

    y_ref = inconv_ref(params, x)
    err = float(jnp.max(jnp.abs(y - y_ref)))
    assert bool(jnp.allclose(y, y_ref, rtol=2e-2, atol=2e-2)), err
    print("KERNEL_OK")
</pallas_src>

<mosaic_0001>
module attributes {stable_mosaic.version = 11 : i64} {
  func.func @kernel(%arg0: i32, %arg1: i32, %arg2: memref<1x8x320xf32, #tpu.memory_space<vmem>>, %arg3: memref<8x200xf32, #tpu.memory_space<vmem>>, %arg4: memref<8x1xf32, #tpu.memory_space<vmem>>, %arg5: memref<8x1xf32, #tpu.memory_space<vmem>>, %arg6: memref<8x1xf32, #tpu.memory_space<vmem>>, %arg7: memref<8x1xf32, #tpu.memory_space<vmem>>, %arg8: memref<1x420xf32, #tpu.memory_space<vmem>>, %arg9: memref<1x8x320xf32, #tpu.memory_space<vmem>>, %arg10: memref<8x420xf32, #tpu.memory_space<vmem>>, %arg11: memref<200x320xf32, #tpu.memory_space<vmem>>) attributes {dimension_semantics = [#tpu.dimension_semantics<parallel>, #tpu.dimension_semantics<parallel>], iteration_bounds = array<i64: 2, 1>, scalar_prefetch = 0 : i64, scratch_operands = 2 : i64, tpu.core_type = #tpu.core_type<tc>, window_params = [{transform_indices = @transform_0, window_bounds = array<i64: 1, 8, 320>}, {pipeline_mode = #tpu.pipeline_mode<synchronous>, transform_indices = @transform_1, window_bounds = array<i64: 8, 200>}, {pipeline_mode = #tpu.pipeline_mode<synchronous>, transform_indices = @transform_2, window_bounds = array<i64: 8, 1>}, {pipeline_mode = #tpu.pipeline_mode<synchronous>, transform_indices = @transform_3, window_bounds = array<i64: 8, 1>}, {pipeline_mode = #tpu.pipeline_mode<synchronous>, transform_indices = @transform_4, window_bounds = array<i64: 8, 1>}, {pipeline_mode = #tpu.pipeline_mode<synchronous>, transform_indices = @transform_5, window_bounds = array<i64: 8, 1>}, {pipeline_mode = #tpu.pipeline_mode<synchronous>, transform_indices = @transform_6, window_bounds = array<i64: 1, 420>}, {transform_indices = @transform_7, window_bounds = array<i64: 1, 8, 320>}]} {
    %cst = arith.constant 0.000000e+00 : f32
    %0 = vector.broadcast %cst : f32 to vector<8x420xf32>
    %c0 = arith.constant 0 : index
    %c0_0 = arith.constant 0 : index
    %1 = vector.load %arg10[%c0, %c0_0] : memref<8x420xf32, #tpu.memory_space<vmem>>, vector<8x420xf32>
    tpu.vector_store %arg10[%c0, %c0_0], %0 {strides = array<i32>} : memref<8x420xf32, #tpu.memory_space<vmem>>, vector<8x420xf32>,
    %c0_1 = arith.constant 0 : index
    %c0_2 = arith.constant 0 : index
    %c0_3 = arith.constant 0 : index
    %2 = vector.load %arg2[%c0_1, %c0_2, %c0_3] : memref<1x8x320xf32, #tpu.memory_space<vmem>>, vector<1x8x320xf32>
    %3 = vector.shape_cast %2 : vector<1x8x320xf32> to vector<8x320xf32>
    %c0_4 = arith.constant 0 : index
    %c0_5 = arith.constant 0 : index
    %4 = vector.load %arg6[%c0_4, %c0_5] : memref<8x1xf32, #tpu.memory_space<vmem>>, vector<8x1xf32>
    %5 = vector.broadcast %4 : vector<8x1xf32> to vector<8x320xf32>
    %6 = arith.mulf %3, %5 : vector<8x320xf32>
    %c0_6 = arith.constant 0 : index
    %c0_7 = arith.constant 0 : index
    %7 = vector.load %arg7[%c0_6, %c0_7] : memref<8x1xf32, #tpu.memory_space<vmem>>, vector<8x1xf32>
    %8 = vector.broadcast %7 : vector<8x1xf32> to vector<8x320xf32>
    %9 = arith.addf %6, %8 : vector<8x320xf32>
    %cst_8 = arith.constant 0.000000e+00 : f32
    %10 = vector.broadcast %cst_8 : f32 to vector<8x320xf32>
    %11 = arith.maximumf %9, %10 : vector<8x320xf32>
    %c0_9 = arith.constant 0 : index
    %c0_10 = arith.constant 0 : index
    %12 = vector.load %arg8[%c0_9, %c0_10] : memref<1x420xf32, #tpu.memory_space<vmem>>, vector<1x320xf32>
    %13 = vector.broadcast %12 : vector<1x320xf32> to vector<8x320xf32>
    %14 = arith.mulf %11, %13 : vector<8x320xf32>
    %c0_11 = arith.constant 0 : index
    %c42 = arith.constant 42 : index
    %15 = vector.load %arg10[%c0_11, %c42] : memref<8x420xf32, #tpu.memory_space<vmem>>, vector<8x320xf32>
    tpu.vector_store %arg10[%c0_11, %c42], %14 {strides = array<i32>} : memref<8x420xf32, #tpu.memory_space<vmem>>, vector<8x320xf32>,
    %c0_12 = arith.constant 0 : index
    %c0_13 = arith.constant 0 : index
    %16 = vector.load %arg10[%c0_12, %c0_13] : memref<8x420xf32, #tpu.memory_space<vmem>>, vector<8x320xf32>
    %c0_14 = arith.constant 0 : index
    %c0_15 = arith.constant 0 : index
    %17 = vector.load %arg11[%c0_14, %c0_15] : memref<200x320xf32, #tpu.memory_space<vmem>>, vector<8x320xf32>
    tpu.vector_store %arg11[%c0_14, %c0_15], %16 {strides = array<i32>} : memref<200x320xf32, #tpu.memory_space<vmem>>, vector<8x320xf32>,
    %c0_16 = arith.constant 0 : index
    %c1 = arith.constant 1 : index
    %18 = vector.load %arg10[%c0_16, %c1] : memref<8x420xf32, #tpu.memory_space<vmem>>, vector<8x320xf32>
    %c8 = arith.constant 8 : index
    %c0_17 = arith.constant 0 : index
    %19 = vector.load %arg11[%c8, %c0_17] : memref<200x320xf32, #tpu.memory_space<vmem>>, vector<8x320xf32>
    tpu.vector_store %arg11[%c8, %c0_17], %18 {strides = array<i32>} : memref<200x320xf32, #tpu.memory_space<vmem>>, vector<8x320xf32>,
    %c0_18 = arith.constant 0 : index
    %c2 = arith.constant 2 : index
    %20 = vector.load %arg10[%c0_18, %c2] : memref<8x420xf32, #tpu.memory_space<vmem>>, vector<8x320xf32>
    %c16 = arith.constant 16 : index
    %c0_19 = arith.constant 0 : index
    %21 = vector.load %arg11[%c16, %c0_19] : memref<200x320xf32, #tpu.memory_space<vmem>>, vector<8x320xf32>
    tpu.vector_store %arg11[%c16, %c0_19], %20 {strides = array<i32>} : memref<200x320xf32, #tpu.memory_space<vmem>>, vector<8x320xf32>,
    %c0_20 = arith.constant 0 : index
    %c3 = arith.constant 3 : index
    %22 = vector.load %arg10[%c0_20, %c3] : memref<8x420xf32, #tpu.memory_space<vmem>>, vector<8x320xf32>
    %c24 = arith.constant 24 : index
    %c0_21 = arith.constant 0 : index
    %23 = vector.load %arg11[%c24, %c0_21] : memref<200x320xf32, #tpu.memory_space<vmem>>, vector<8x320xf32>
    tpu.vector_store %arg11[%c24, %c0_21], %22 {strides = array<i32>} : memref<200x320xf32, #tpu.memory_space<vmem>>, vector<8x320xf32>,
    %c0_22 = arith.constant 0 : index
    %c4 = arith.constant 4 : index
    %24 = vector.load %arg10[%c0_22, %c4] : memref<8x420xf32, #tpu.memory_space<vmem>>, vector<8x320xf32>
    %c32 = arith.constant 32 : index
    %c0_23 = arith.constant 0 : index
    %25 = vector.load %arg11[%c32, %c0_23] : memref<200x320xf32, #tpu.memory_space<vmem>>, vector<8x320xf32>
    tpu.vector_store %arg11[%c32, %c0_23], %24 {strides = array<i32>} : memref<200x320xf32, #tpu.memory_space<vmem>>, vector<8x320xf32>,
    %c0_24 = arith.constant 0 : index
    %c20 = arith.constant 20 : index
    %26 = vector.load %arg10[%c0_24, %c20] : memref<8x420xf32, #tpu.memory_space<vmem>>, vector<8x320xf32>
    %c40 = arith.constant 40 : index
    %c0_25 = arith.constant 0 : index
    %27 = vector.load %arg11[%c40, %c0_25] : memref<200x320xf32, #tpu.memory_space<vmem>>, vector<8x320xf32>
    tpu.vector_store %arg11[%c40, %c0_25], %26 {strides = array<i32>} : memref<200x320xf32, #tpu.memory_space<vmem>>, vector<8x320xf32>,
    %c0_26 = arith.constant 0 : index
    %c21 = arith.constant 21 : index
    %28 = vector.load %arg10[%c0_26, %c21] : memref<8x420xf32, #tpu.memory_space<vmem>>, vector<8x320xf32>
    %c48 = arith.constant 48 : index
    %c0_27 = arith.constant 0 : index
    %29 = vector.load %arg11[%c48, %c0_27] : memref<200x320xf32, #tpu.memory_space<vmem>>, vector<8x320xf32>
    tpu.vector_store %arg11[%c48, %c0_27], %28 {strides = array<i32>} : memref<200x320xf32, #tpu.memory_space<vmem>>, vector<8x320xf32>,
    %c0_28 = arith.constant 0 : index
    %c22 = arith.constant 22 : index
    %30 = vector.load %arg10[%c0_28, %c22] : memref<8x420xf32, #tpu.memory_space<vmem>>, vector<8x320xf32>
    %c56 = arith.constant 56 : index
    %c0_29 = arith.constant 0 : index
    %31 = vector.load %arg11[%c56, %c0_29] : memref<200x320xf32, #tpu.memory_space<vmem>>, vector<8x320xf32>
    tpu.vector_store %arg11[%c56, %c0_29], %30 {strides = array<i32>} : memref<200x320xf32, #tpu.memory_space<vmem>>, vector<8x320xf32>,
    %c0_30 = arith.constant 0 : index
    %c23 = arith.constant 23 : index
    %32 = vector.load %arg10[%c0_30, %c23] : memref<8x420xf32, #tpu.memory_space<vmem>>, vector<8x320xf32>
    %c64 = arith.constant 64 : index
    %c0_31 = arith.constant 0 : index
    %33 = vector.load %arg11[%c64, %c0_31] : memref<200x320xf32, #tpu.memory_space<vmem>>, vector<8x320xf32>
    tpu.vector_store %arg11[%c64, %c0_31], %32 {strides = array<i32>} : memref<200x320xf32, #tpu.memory_space<vmem>>, vector<8x320xf32>,
    %c0_32 = arith.constant 0 : index
    %c24_33 = arith.constant 24 : index
    %34 = vector.load %arg10[%c0_32, %c24_33] : memref<8x420xf32, #tpu.memory_space<vmem>>, vector<8x320xf32>
    %c72 = arith.constant 72 : index
    %c0_34 = arith.constant 0 : index
    %35 = vector.load %arg11[%c72, %c0_34] : memref<200x320xf32, #tpu.memory_space<vmem>>, vector<8x320xf32>
    tpu.vector_store %arg11[%c72, %c0_34], %34 {strides = array<i32>} : memref<200x320xf32, #tpu.memory_space<vmem>>, vector<8x320xf32>,
    %c0_35 = arith.constant 0 : index
    %c40_36 = arith.constant 40 : index
    %36 = vector.load %arg10[%c0_35, %c40_36] : memref<8x420xf32, #tpu.memory_space<vmem>>, vector<8x320xf32>
    %c80 = arith.constant 80 : index
    %c0_37 = arith.constant 0 : index
    %37 = vector.load %arg11[%c80, %c0_37] : memref<200x320xf32, #tpu.memory_space<vmem>>, vector<8x320xf32>
    tpu.vector_store %arg11[%c80, %c0_37], %36 {strides = array<i32>} : memref<200x320xf32, #tpu.memory_space<vmem>>, vector<8x320xf32>,
    %c0_38 = arith.constant 0 : index
    %c41 = arith.constant 41 : index
    %38 = vector.load %arg10[%c0_38, %c41] : memref<8x420xf32, #tpu.memory_space<vmem>>, vector<8x320xf32>
    %c88 = arith.constant 88 : index
    %c0_39 = arith.constant 0 : index
    %39 = vector.load %arg11[%c88, %c0_39] : memref<200x320xf32, #tpu.memory_space<vmem>>, vector<8x320xf32>
    tpu.vector_store %arg11[%c88, %c0_39], %38 {strides = array<i32>} : memref<200x320xf32, #tpu.memory_space<vmem>>, vector<8x320xf32>,
    %c0_40 = arith.constant 0 : index
    %c42_41 = arith.constant 42 : index
    %40 = vector.load %arg10[%c0_40, %c42_41] : memref<8x420xf32, #tpu.memory_space<vmem>>, vector<8x320xf32>
    %c96 = arith.constant 96 : index
    %c0_42 = arith.constant 0 : index
    %41 = vector.load %arg11[%c96, %c0_42] : memref<200x320xf32, #tpu.memory_space<vmem>>, vector<8x320xf32>
    tpu.vector_store %arg11[%c96, %c0_42], %40 {strides = array<i32>} : memref<200x320xf32, #tpu.memory_space<vmem>>, vector<8x320xf32>,
    %c0_43 = arith.constant 0 : index
    %c43 = arith.constant 43 : index
    %42 = vector.load %arg10[%c0_43, %c43] : memref<8x420xf32, #tpu.memory_space<vmem>>, vector<8x320xf32>
    %c104 = arith.constant 104 : index
    %c0_44 = arith.constant 0 : index
    %43 = vector.load %arg11[%c104, %c0_44] : memref<200x320xf32, #tpu.memory_space<vmem>>, vector<8x320xf32>
    tpu.vector_store %arg11[%c104, %c0_44], %42 {strides = array<i32>} : memref<200x320xf32, #tpu.memory_space<vmem>>, vector<8x320xf32>,
    %c0_45 = arith.constant 0 : index
    %c44 = arith.constant 44 : index
    %44 = vector.load %arg10[%c0_45, %c44] : memref<8x420xf32, #tpu.memory_space<vmem>>, vector<8x320xf32>
    %c112 = arith.constant 112 : index
    %c0_46 = arith.constant 0 : index
    %45 = vector.load %arg11[%c112, %c0_46] : memref<200x320xf32, #tpu.memory_space<vmem>>, vector<8x320xf32>
    tpu.vector_store %arg11[%c112, %c0_46], %44 {strides = array<i32>} : memref<200x320xf32, #tpu.memory_space<vmem>>, vector<8x320xf32>,
    %c0_47 = arith.constant 0 : index
    %c60 = arith.constant 60 : index
    %46 = vector.load %arg10[%c0_47, %c60] : memref<8x420xf32, #tpu.memory_space<vmem>>, vector<8x320xf32>
    %c120 = arith.constant 120 : index
    %c0_48 = arith.constant 0 : index
    %47 = vector.load %arg11[%c120, %c0_48] : memref<200x320xf32, #tpu.memory_space<vmem>>, vector<8x320xf32>
    tpu.vector_store %arg11[%c120, %c0_48], %46 {strides = array<i32>} : memref<200x320xf32, #tpu.memory_space<vmem>>, vector<8x320xf32>,
    %c0_49 = arith.constant 0 : index
    %c61 = arith.constant 61 : index
    %48 = vector.load %arg10[%c0_49, %c61] : memref<8x420xf32, #tpu.memory_space<vmem>>, vector<8x320xf32>
    %c128 = arith.constant 128 : index
    %c0_50 = arith.constant 0 : index
    %49 = vector.load %arg11[%c128, %c0_50] : memref<200x320xf32, #tpu.memory_space<vmem>>, vector<8x320xf32>
    tpu.vector_store %arg11[%c128, %c0_50], %48 {strides = array<i32>} : memref<200x320xf32, #tpu.memory_space<vmem>>, vector<8x320xf32>,
    %c0_51 = arith.constant 0 : index
    %c62 = arith.constant 62 : index
    %50 = vector.load %arg10[%c0_51, %c62] : memref<8x420xf32, #tpu.memory_space<vmem>>, vector<8x320xf32>
    %c136 = arith.constant 136 : index
    %c0_52 = arith.constant 0 : index
    %51 = vector.load %arg11[%c136, %c0_52] : memref<200x320xf32, #tpu.memory_space<vmem>>, vector<8x320xf32>
    tpu.vector_store %arg11[%c136, %c0_52], %50 {strides = array<i32>} : memref<200x320xf32, #tpu.memory_space<vmem>>, vector<8x320xf32>,
    %c0_53 = arith.constant 0 : index
    %c63 = arith.constant 63 : index
    %52 = vector.load %arg10[%c0_53, %c63] : memref<8x420xf32, #tpu.memory_space<vmem>>, vector<8x320xf32>
    %c144 = arith.constant 144 : index
    %c0_54 = arith.constant 0 : index
    %53 = vector.load %arg11[%c144, %c0_54] : memref<200x320xf32, #tpu.memory_space<vmem>>, vector<8x320xf32>
    tpu.vector_store %arg11[%c144, %c0_54], %52 {strides = array<i32>} : memref<200x320xf32, #tpu.memory_space<vmem>>, vector<8x320xf32>,
    %c0_55 = arith.constant 0 : index
    %c64_56 = arith.constant 64 : index
    %54 = vector.load %arg10[%c0_55, %c64_56] : memref<8x420xf32, #tpu.memory_space<vmem>>, vector<8x320xf32>
    %c152 = arith.constant 152 : index
    %c0_57 = arith.constant 0 : index
    %55 = vector.load %arg11[%c152, %c0_57] : memref<200x320xf32, #tpu.memory_space<vmem>>, vector<8x320xf32>
    tpu.vector_store %arg11[%c152, %c0_57], %54 {strides = array<i32>} : memref<200x320xf32, #tpu.memory_space<vmem>>, vector<8x320xf32>,
    %c0_58 = arith.constant 0 : index
    %c80_59 = arith.constant 80 : index
    %56 = vector.load %arg10[%c0_58, %c80_59] : memref<8x420xf32, #tpu.memory_space<vmem>>, vector<8x320xf32>
    %c160 = arith.constant 160 : index
    %c0_60 = arith.constant 0 : index
    %57 = vector.load %arg11[%c160, %c0_60] : memref<200x320xf32, #tpu.memory_space<vmem>>, vector<8x320xf32>
    tpu.vector_store %arg11[%c160, %c0_60], %56 {strides = array<i32>} : memref<200x320xf32, #tpu.memory_space<vmem>>, vector<8x320xf32>,
    %c0_61 = arith.constant 0 : index
    %c81 = arith.constant 81 : index
    %58 = vector.load %arg10[%c0_61, %c81] : memref<8x420xf32, #tpu.memory_space<vmem>>, vector<8x320xf32>
    %c168 = arith.constant 168 : index
    %c0_62 = arith.constant 0 : index
    %59 = vector.load %arg11[%c168, %c0_62] : memref<200x320xf32, #tpu.memory_space<vmem>>, vector<8x320xf32>
    tpu.vector_store %arg11[%c168, %c0_62], %58 {strides = array<i32>} : memref<200x320xf32, #tpu.memory_space<vmem>>, vector<8x320xf32>,
    %c0_63 = arith.constant 0 : index
    %c82 = arith.constant 82 : index
    %60 = vector.load %arg10[%c0_63, %c82] : memref<8x420xf32, #tpu.memory_space<vmem>>, vector<8x320xf32>
    %c176 = arith.constant 176 : index
    %c0_64 = arith.constant 0 : index
    %61 = vector.load %arg11[%c176, %c0_64] : memref<200x320xf32, #tpu.memory_space<vmem>>, vector<8x320xf32>
    tpu.vector_store %arg11[%c176, %c0_64], %60 {strides = array<i32>} : memref<200x320xf32, #tpu.memory_space<vmem>>, vector<8x320xf32>,
    %c0_65 = arith.constant 0 : index
    %c83 = arith.constant 83 : index
    %62 = vector.load %arg10[%c0_65, %c83] : memref<8x420xf32, #tpu.memory_space<vmem>>, vector<8x320xf32>
    %c184 = arith.constant 184 : index
    %c0_66 = arith.constant 0 : index
    %63 = vector.load %arg11[%c184, %c0_66] : memref<200x320xf32, #tpu.memory_space<vmem>>, vector<8x320xf32>
    tpu.vector_store %arg11[%c184, %c0_66], %62 {strides = array<i32>} : memref<200x320xf32, #tpu.memory_space<vmem>>, vector<8x320xf32>,
    %c0_67 = arith.constant 0 : index
    %c84 = arith.constant 84 : index
    %64 = vector.load %arg10[%c0_67, %c84] : memref<8x420xf32, #tpu.memory_space<vmem>>, vector<8x320xf32>
    %c192 = arith.constant 192 : index
    %c0_68 = arith.constant 0 : index
    %65 = vector.load %arg11[%c192, %c0_68] : memref<200x320xf32, #tpu.memory_space<vmem>>, vector<8x320xf32>
    tpu.vector_store %arg11[%c192, %c0_68], %64 {strides = array<i32>} : memref<200x320xf32, #tpu.memory_space<vmem>>, vector<8x320xf32>,
    %c0_69 = arith.constant 0 : index
    %c0_70 = arith.constant 0 : index
    %66 = vector.load %arg3[%c0_69, %c0_70] : memref<8x200xf32, #tpu.memory_space<vmem>>, vector<8x200xf32>
    %c0_71 = arith.constant 0 : index
    %c0_72 = arith.constant 0 : index
    %67 = vector.load %arg11[%c0_71, %c0_72] : memref<200x320xf32, #tpu.memory_space<vmem>>, vector<200x320xf32>
    %cst_73 = arith.constant dense<0.000000e+00> : vector<8x320xf32>
    %68 = tpu.matmul %66, %67, %cst_73 {dimension_numbers = #tpu.dot_dimension_numbers<[1], [0], [0], [1], [0, 0, 1, 1], [], []>} : vector<8x200xf32>, vector<200x320xf32>, vector<8x320xf32> -> vector<8x320xf32>
    %c0_74 = arith.constant 0 : index
    %c0_75 = arith.constant 0 : index
    %69 = vector.load %arg4[%c0_74, %c0_75] : memref<8x1xf32, #tpu.memory_space<vmem>>, vector<8x1xf32>
    %70 = vector.broadcast %69 : vector<8x1xf32> to vector<8x320xf32>
    %71 = arith.mulf %68, %70 : vector<8x320xf32>
    %c0_76 = arith.constant 0 : index
    %c0_77 = arith.constant 0 : index
    %72 = vector.load %arg5[%c0_76, %c0_77] : memref<8x1xf32, #tpu.memory_space<vmem>>, vector<8x1xf32>
    %73 = vector.broadcast %72 : vector<8x1xf32> to vector<8x320xf32>
    %74 = arith.addf %71, %73 : vector<8x320xf32>
    %cst_78 = arith.constant 0.000000e+00 : f32
    %75 = vector.broadcast %cst_78 : f32 to vector<8x320xf32>
    %76 = arith.maximumf %74, %75 : vector<8x320xf32>
    %c0_79 = arith.constant 0 : index
    %c0_80 = arith.constant 0 : index
    %77 = vector.load %arg8[%c0_79, %c0_80] : memref<1x420xf32, #tpu.memory_space<vmem>>, vector<1x320xf32>
    %78 = vector.broadcast %77 : vector<1x320xf32> to vector<8x320xf32>
    %79 = arith.mulf %76, %78 : vector<8x320xf32>
    %c0_81 = arith.constant 0 : index
    %c0_82 = arith.constant 0 : index
    %c0_83 = arith.constant 0 : index
    %80 = vector.load %arg9[%c0_81, %c0_82, %c0_83] : memref<1x8x320xf32, #tpu.memory_space<vmem>>, vector<1x8x320xf32>
    %81 = vector.shape_cast %80 : vector<1x8x320xf32> to vector<8x320xf32>
    %82 = vector.shape_cast %79 : vector<8x320xf32> to vector<1x8x320xf32>
    tpu.vector_store %arg9[%c0_81, %c0_82, %c0_83], %82 {strides = array<i32>} : memref<1x8x320xf32, #tpu.memory_space<vmem>>, vector<1x8x320xf32>,
    return
  }
  func.func @transform_0(%arg0: i32, %arg1: i32) -> (i32, i32, i32) {
    %c0_i32 = arith.constant 0 : i32
    %c0_i32_0 = arith.constant 0 : i32
    %c0_i32_1 = arith.constant 0 : i32
    return %arg0, %c0_i32, %c0_i32_0 : i32, i32, i32
  }
  func.func @transform_1(%arg0: i32, %arg1: i32) -> (i32, i32) {
    %c0_i32 = arith.constant 0 : i32
    %c0_i32_0 = arith.constant 0 : i32
    %c0_i32_1 = arith.constant 0 : i32
    return %c0_i32, %c0_i32_0 : i32, i32
  }
  func.func @transform_2(%arg0: i32, %arg1: i32) -> (i32, i32) {
    %c0_i32 = arith.constant 0 : i32
    %c0_i32_0 = arith.constant 0 : i32
    %c0_i32_1 = arith.constant 0 : i32
    return %c0_i32, %c0_i32_0 : i32, i32
  }
  func.func @transform_3(%arg0: i32, %arg1: i32) -> (i32, i32) {
    %c0_i32 = arith.constant 0 : i32
    %c0_i32_0 = arith.constant 0 : i32
    %c0_i32_1 = arith.constant 0 : i32
    return %c0_i32, %c0_i32_0 : i32, i32
  }
  func.func @transform_4(%arg0: i32, %arg1: i32) -> (i32, i32) {
    %c0_i32 = arith.constant 0 : i32
    %c0_i32_0 = arith.constant 0 : i32
    %c0_i32_1 = arith.constant 0 : i32
    return %c0_i32, %c0_i32_0 : i32, i32
  }
  func.func @transform_5(%arg0: i32, %arg1: i32) -> (i32, i32) {
    %c0_i32 = arith.constant 0 : i32
    %c0_i32_0 = arith.constant 0 : i32
    %c0_i32_1 = arith.constant 0 : i32
    return %c0_i32, %c0_i32_0 : i32, i32
  }
  func.func @transform_6(%arg0: i32, %arg1: i32) -> (i32, i32) {
    %c0_i32 = arith.constant 0 : i32
    %c0_i32_0 = arith.constant 0 : i32
    %c0_i32_1 = arith.constant 0 : i32
    return %c0_i32, %c0_i32_0 : i32, i32
  }
  func.func @transform_7(%arg0: i32, %arg1: i32) -> (i32, i32, i32) {
    %c0_i32 = arith.constant 0 : i32
    %c0_i32_0 = arith.constant 0 : i32
    return %arg0, %c0_i32, %arg1 : i32, i32, i32
  }
}

module attributes {stable_mosaic.version = 11 : i64} {
  func.func @kernel(%arg0: i32, %arg1: i32, %arg2: memref<1x8x320xf32, #tpu.memory_space<vmem>>, %arg3: memref<8x200xf32, #tpu.memory_space<vmem>>, %arg4: memref<8x1xf32, #tpu.memory_space<vmem>>, %arg5: memref<8x1xf32, #tpu.memory_space<vmem>>, %arg6: memref<8x1xf32, #tpu.memory_space<vmem>>, %arg7: memref<8x1xf32, #tpu.memory_space<vmem>>, %arg8: memref<1x420xf32, #tpu.memory_space<vmem>>, %arg9: memref<1x8x320xf32, #tpu.memory_space<vmem>>, %arg10: memref<8x420xf32, #tpu.memory_space<vmem>>, %arg11: memref<200x320xf32, #tpu.memory_space<vmem>>) attributes {dimension_semantics = [#tpu.dimension_semantics<parallel>, #tpu.dimension_semantics<parallel>], iteration_bounds = array<i64: 2, 1>, scalar_prefetch = 0 : i64, scratch_operands = 2 : i64, tpu.core_type = #tpu.core_type<tc>, window_params = [{transform_indices = @transform_0, window_bounds = array<i64: 1, 8, 320>}, {pipeline_mode = #tpu.pipeline_mode<synchronous>, transform_indices = @transform_1, window_bounds = array<i64: 8, 200>}, {pipeline_mode = #tpu.pipeline_mode<synchronous>, transform_indices = @transform_2, window_bounds = array<i64: 8, 1>}, {pipeline_mode = #tpu.pipeline_mode<synchronous>, transform_indices = @transform_3, window_bounds = array<i64: 8, 1>}, {pipeline_mode = #tpu.pipeline_mode<synchronous>, transform_indices = @transform_4, window_bounds = array<i64: 8, 1>}, {pipeline_mode = #tpu.pipeline_mode<synchronous>, transform_indices = @transform_5, window_bounds = array<i64: 8, 1>}, {pipeline_mode = #tpu.pipeline_mode<synchronous>, transform_indices = @transform_6, window_bounds = array<i64: 1, 420>}, {transform_indices = @transform_7, window_bounds = array<i64: 1, 8, 320>}]} {
    %cst = arith.constant 0.000000e+00 : f32
    %0 = vector.broadcast %cst : f32 to vector<8x420xf32>
    %c0 = arith.constant 0 : index
    %c0_0 = arith.constant 0 : index
    %1 = vector.load %arg10[%c0, %c0_0] : memref<8x420xf32, #tpu.memory_space<vmem>>, vector<8x420xf32>
    tpu.vector_store %arg10[%c0, %c0_0], %0 {strides = array<i32>} : memref<8x420xf32, #tpu.memory_space<vmem>>, vector<8x420xf32>,
    %c0_1 = arith.constant 0 : index
    %c0_2 = arith.constant 0 : index
    %c0_3 = arith.constant 0 : index
    %2 = vector.load %arg2[%c0_1, %c0_2, %c0_3] : memref<1x8x320xf32, #tpu.memory_space<vmem>>, vector<1x8x320xf32>
    %3 = vector.shape_cast %2 : vector<1x8x320xf32> to vector<8x320xf32>
    %c0_4 = arith.constant 0 : index
    %c42 = arith.constant 42 : index
    %4 = vector.load %arg10[%c0_4, %c42] : memref<8x420xf32, #tpu.memory_space<vmem>>, vector<8x320xf32>
    tpu.vector_store %arg10[%c0_4, %c42], %3 {strides = array<i32>} : memref<8x420xf32, #tpu.memory_space<vmem>>, vector<8x320xf32>,
    %c0_5 = arith.constant 0 : index
    %c0_6 = arith.constant 0 : index
    %5 = vector.load %arg10[%c0_5, %c0_6] : memref<8x420xf32, #tpu.memory_space<vmem>>, vector<8x320xf32>
    %c0_7 = arith.constant 0 : index
    %c0_8 = arith.constant 0 : index
    %6 = vector.load %arg11[%c0_7, %c0_8] : memref<200x320xf32, #tpu.memory_space<vmem>>, vector<8x320xf32>
    tpu.vector_store %arg11[%c0_7, %c0_8], %5 {strides = array<i32>} : memref<200x320xf32, #tpu.memory_space<vmem>>, vector<8x320xf32>,
    %c0_9 = arith.constant 0 : index
    %c1 = arith.constant 1 : index
    %7 = vector.load %arg10[%c0_9, %c1] : memref<8x420xf32, #tpu.memory_space<vmem>>, vector<8x320xf32>
    %c8 = arith.constant 8 : index
    %c0_10 = arith.constant 0 : index
    %8 = vector.load %arg11[%c8, %c0_10] : memref<200x320xf32, #tpu.memory_space<vmem>>, vector<8x320xf32>
    tpu.vector_store %arg11[%c8, %c0_10], %7 {strides = array<i32>} : memref<200x320xf32, #tpu.memory_space<vmem>>, vector<8x320xf32>,
    %c0_11 = arith.constant 0 : index
    %c2 = arith.constant 2 : index
    %9 = vector.load %arg10[%c0_11, %c2] : memref<8x420xf32, #tpu.memory_space<vmem>>, vector<8x320xf32>
    %c16 = arith.constant 16 : index
    %c0_12 = arith.constant 0 : index
    %10 = vector.load %arg11[%c16, %c0_12] : memref<200x320xf32, #tpu.memory_space<vmem>>, vector<8x320xf32>
    tpu.vector_store %arg11[%c16, %c0_12], %9 {strides = array<i32>} : memref<200x320xf32, #tpu.memory_space<vmem>>, vector<8x320xf32>,
    %c0_13 = arith.constant 0 : index
    %c3 = arith.constant 3 : index
    %11 = vector.load %arg10[%c0_13, %c3] : memref<8x420xf32, #tpu.memory_space<vmem>>, vector<8x320xf32>
    %c24 = arith.constant 24 : index
    %c0_14 = arith.constant 0 : index
    %12 = vector.load %arg11[%c24, %c0_14] : memref<200x320xf32, #tpu.memory_space<vmem>>, vector<8x320xf32>
    tpu.vector_store %arg11[%c24, %c0_14], %11 {strides = array<i32>} : memref<200x320xf32, #tpu.memory_space<vmem>>, vector<8x320xf32>,
    %c0_15 = arith.constant 0 : index
    %c4 = arith.constant 4 : index
    %13 = vector.load %arg10[%c0_15, %c4] : memref<8x420xf32, #tpu.memory_space<vmem>>, vector<8x320xf32>
    %c32 = arith.constant 32 : index
    %c0_16 = arith.constant 0 : index
    %14 = vector.load %arg11[%c32, %c0_16] : memref<200x320xf32, #tpu.memory_space<vmem>>, vector<8x320xf32>
    tpu.vector_store %arg11[%c32, %c0_16], %13 {strides = array<i32>} : memref<200x320xf32, #tpu.memory_space<vmem>>, vector<8x320xf32>,
    %c0_17 = arith.constant 0 : index
    %c20 = arith.constant 20 : index
    %15 = vector.load %arg10[%c0_17, %c20] : memref<8x420xf32, #tpu.memory_space<vmem>>, vector<8x320xf32>
    %c40 = arith.constant 40 : index
    %c0_18 = arith.constant 0 : index
    %16 = vector.load %arg11[%c40, %c0_18] : memref<200x320xf32, #tpu.memory_space<vmem>>, vector<8x320xf32>
    tpu.vector_store %arg11[%c40, %c0_18], %15 {strides = array<i32>} : memref<200x320xf32, #tpu.memory_space<vmem>>, vector<8x320xf32>,
    %c0_19 = arith.constant 0 : index
    %c21 = arith.constant 21 : index
    %17 = vector.load %arg10[%c0_19, %c21] : memref<8x420xf32, #tpu.memory_space<vmem>>, vector<8x320xf32>
    %c48 = arith.constant 48 : index
    %c0_20 = arith.constant 0 : index
    %18 = vector.load %arg11[%c48, %c0_20] : memref<200x320xf32, #tpu.memory_space<vmem>>, vector<8x320xf32>
    tpu.vector_store %arg11[%c48, %c0_20], %17 {strides = array<i32>} : memref<200x320xf32, #tpu.memory_space<vmem>>, vector<8x320xf32>,
    %c0_21 = arith.constant 0 : index
    %c22 = arith.constant 22 : index
    %19 = vector.load %arg10[%c0_21, %c22] : memref<8x420xf32, #tpu.memory_space<vmem>>, vector<8x320xf32>
    %c56 = arith.constant 56 : index
    %c0_22 = arith.constant 0 : index
    %20 = vector.load %arg11[%c56, %c0_22] : memref<200x320xf32, #tpu.memory_space<vmem>>, vector<8x320xf32>
    tpu.vector_store %arg11[%c56, %c0_22], %19 {strides = array<i32>} : memref<200x320xf32, #tpu.memory_space<vmem>>, vector<8x320xf32>,
    %c0_23 = arith.constant 0 : index
    %c23 = arith.constant 23 : index
    %21 = vector.load %arg10[%c0_23, %c23] : memref<8x420xf32, #tpu.memory_space<vmem>>, vector<8x320xf32>
    %c64 = arith.constant 64 : index
    %c0_24 = arith.constant 0 : index
    %22 = vector.load %arg11[%c64, %c0_24] : memref<200x320xf32, #tpu.memory_space<vmem>>, vector<8x320xf32>
    tpu.vector_store %arg11[%c64, %c0_24], %21 {strides = array<i32>} : memref<200x320xf32, #tpu.memory_space<vmem>>, vector<8x320xf32>,
    %c0_25 = arith.constant 0 : index
    %c24_26 = arith.constant 24 : index
    %23 = vector.load %arg10[%c0_25, %c24_26] : memref<8x420xf32, #tpu.memory_space<vmem>>, vector<8x320xf32>
    %c72 = arith.constant 72 : index
    %c0_27 = arith.constant 0 : index
    %24 = vector.load %arg11[%c72, %c0_27] : memref<200x320xf32, #tpu.memory_space<vmem>>, vector<8x320xf32>
    tpu.vector_store %arg11[%c72, %c0_27], %23 {strides = array<i32>} : memref<200x320xf32, #tpu.memory_space<vmem>>, vector<8x320xf32>,
    %c0_28 = arith.constant 0 : index
    %c40_29 = arith.constant 40 : index
    %25 = vector.load %arg10[%c0_28, %c40_29] : memref<8x420xf32, #tpu.memory_space<vmem>>, vector<8x320xf32>
    %c80 = arith.constant 80 : index
    %c0_30 = arith.constant 0 : index
    %26 = vector.load %arg11[%c80, %c0_30] : memref<200x320xf32, #tpu.memory_space<vmem>>, vector<8x320xf32>
    tpu.vector_store %arg11[%c80, %c0_30], %25 {strides = array<i32>} : memref<200x320xf32, #tpu.memory_space<vmem>>, vector<8x320xf32>,
    %c0_31 = arith.constant 0 : index
    %c41 = arith.constant 41 : index
    %27 = vector.load %arg10[%c0_31, %c41] : memref<8x420xf32, #tpu.memory_space<vmem>>, vector<8x320xf32>
    %c88 = arith.constant 88 : index
    %c0_32 = arith.constant 0 : index
    %28 = vector.load %arg11[%c88, %c0_32] : memref<200x320xf32, #tpu.memory_space<vmem>>, vector<8x320xf32>
    tpu.vector_store %arg11[%c88, %c0_32], %27 {strides = array<i32>} : memref<200x320xf32, #tpu.memory_space<vmem>>, vector<8x320xf32>,
    %c0_33 = arith.constant 0 : index
    %c42_34 = arith.constant 42 : index
    %29 = vector.load %arg10[%c0_33, %c42_34] : memref<8x420xf32, #tpu.memory_space<vmem>>, vector<8x320xf32>
    %c96 = arith.constant 96 : index
    %c0_35 = arith.constant 0 : index
    %30 = vector.load %arg11[%c96, %c0_35] : memref<200x320xf32, #tpu.memory_space<vmem>>, vector<8x320xf32>
    tpu.vector_store %arg11[%c96, %c0_35], %29 {strides = array<i32>} : memref<200x320xf32, #tpu.memory_space<vmem>>, vector<8x320xf32>,
    %c0_36 = arith.constant 0 : index
    %c43 = arith.constant 43 : index
    %31 = vector.load %arg10[%c0_36, %c43] : memref<8x420xf32, #tpu.memory_space<vmem>>, vector<8x320xf32>
    %c104 = arith.constant 104 : index
    %c0_37 = arith.constant 0 : index
    %32 = vector.load %arg11[%c104, %c0_37] : memref<200x320xf32, #tpu.memory_space<vmem>>, vector<8x320xf32>
    tpu.vector_store %arg11[%c104, %c0_37], %31 {strides = array<i32>} : memref<200x320xf32, #tpu.memory_space<vmem>>, vector<8x320xf32>,
    %c0_38 = arith.constant 0 : index
    %c44 = arith.constant 44 : index
    %33 = vector.load %arg10[%c0_38, %c44] : memref<8x420xf32, #tpu.memory_space<vmem>>, vector<8x320xf32>
    %c112 = arith.constant 112 : index
    %c0_39 = arith.constant 0 : index
    %34 = vector.load %arg11[%c112, %c0_39] : memref<200x320xf32, #tpu.memory_space<vmem>>, vector<8x320xf32>
    tpu.vector_store %arg11[%c112, %c0_39], %33 {strides = array<i32>} : memref<200x320xf32, #tpu.memory_space<vmem>>, vector<8x320xf32>,
    %c0_40 = arith.constant 0 : index
    %c60 = arith.constant 60 : index
    %35 = vector.load %arg10[%c0_40, %c60] : memref<8x420xf32, #tpu.memory_space<vmem>>, vector<8x320xf32>
    %c120 = arith.constant 120 : index
    %c0_41 = arith.constant 0 : index
    %36 = vector.load %arg11[%c120, %c0_41] : memref<200x320xf32, #tpu.memory_space<vmem>>, vector<8x320xf32>
    tpu.vector_store %arg11[%c120, %c0_41], %35 {strides = array<i32>} : memref<200x320xf32, #tpu.memory_space<vmem>>, vector<8x320xf32>,
    %c0_42 = arith.constant 0 : index
    %c61 = arith.constant 61 : index
    %37 = vector.load %arg10[%c0_42, %c61] : memref<8x420xf32, #tpu.memory_space<vmem>>, vector<8x320xf32>
    %c128 = arith.constant 128 : index
    %c0_43 = arith.constant 0 : index
    %38 = vector.load %arg11[%c128, %c0_43] : memref<200x320xf32, #tpu.memory_space<vmem>>, vector<8x320xf32>
    tpu.vector_store %arg11[%c128, %c0_43], %37 {strides = array<i32>} : memref<200x320xf32, #tpu.memory_space<vmem>>, vector<8x320xf32>,
    %c0_44 = arith.constant 0 : index
    %c62 = arith.constant 62 : index
    %39 = vector.load %arg10[%c0_44, %c62] : memref<8x420xf32, #tpu.memory_space<vmem>>, vector<8x320xf32>
    %c136 = arith.constant 136 : index
    %c0_45 = arith.constant 0 : index
    %40 = vector.load %arg11[%c136, %c0_45] : memref<200x320xf32, #tpu.memory_space<vmem>>, vector<8x320xf32>
    tpu.vector_store %arg11[%c136, %c0_45], %39 {strides = array<i32>} : memref<200x320xf32, #tpu.memory_space<vmem>>, vector<8x320xf32>,
    %c0_46 = arith.constant 0 : index
    %c63 = arith.constant 63 : index
    %41 = vector.load %arg10[%c0_46, %c63] : memref<8x420xf32, #tpu.memory_space<vmem>>, vector<8x320xf32>
    %c144 = arith.constant 144 : index
    %c0_47 = arith.constant 0 : index
    %42 = vector.load %arg11[%c144, %c0_47] : memref<200x320xf32, #tpu.memory_space<vmem>>, vector<8x320xf32>
    tpu.vector_store %arg11[%c144, %c0_47], %41 {strides = array<i32>} : memref<200x320xf32, #tpu.memory_space<vmem>>, vector<8x320xf32>,
    %c0_48 = arith.constant 0 : index
    %c64_49 = arith.constant 64 : index
    %43 = vector.load %arg10[%c0_48, %c64_49] : memref<8x420xf32, #tpu.memory_space<vmem>>, vector<8x320xf32>
    %c152 = arith.constant 152 : index
    %c0_50 = arith.constant 0 : index
    %44 = vector.load %arg11[%c152, %c0_50] : memref<200x320xf32, #tpu.memory_space<vmem>>, vector<8x320xf32>
    tpu.vector_store %arg11[%c152, %c0_50], %43 {strides = array<i32>} : memref<200x320xf32, #tpu.memory_space<vmem>>, vector<8x320xf32>,
    %c0_51 = arith.constant 0 : index
    %c80_52 = arith.constant 80 : index
    %45 = vector.load %arg10[%c0_51, %c80_52] : memref<8x420xf32, #tpu.memory_space<vmem>>, vector<8x320xf32>
    %c160 = arith.constant 160 : index
    %c0_53 = arith.constant 0 : index
    %46 = vector.load %arg11[%c160, %c0_53] : memref<200x320xf32, #tpu.memory_space<vmem>>, vector<8x320xf32>
    tpu.vector_store %arg11[%c160, %c0_53], %45 {strides = array<i32>} : memref<200x320xf32, #tpu.memory_space<vmem>>, vector<8x320xf32>,
    %c0_54 = arith.constant 0 : index
    %c81 = arith.constant 81 : index
    %47 = vector.load %arg10[%c0_54, %c81] : memref<8x420xf32, #tpu.memory_space<vmem>>, vector<8x320xf32>
    %c168 = arith.constant 168 : index
    %c0_55 = arith.constant 0 : index
    %48 = vector.load %arg11[%c168, %c0_55] : memref<200x320xf32, #tpu.memory_space<vmem>>, vector<8x320xf32>
    tpu.vector_store %arg11[%c168, %c0_55], %47 {strides = array<i32>} : memref<200x320xf32, #tpu.memory_space<vmem>>, vector<8x320xf32>,
    %c0_56 = arith.constant 0 : index
    %c82 = arith.constant 82 : index
    %49 = vector.load %arg10[%c0_56, %c82] : memref<8x420xf32, #tpu.memory_space<vmem>>, vector<8x320xf32>
    %c176 = arith.constant 176 : index
    %c0_57 = arith.constant 0 : index
    %50 = vector.load %arg11[%c176, %c0_57] : memref<200x320xf32, #tpu.memory_space<vmem>>, vector<8x320xf32>
    tpu.vector_store %arg11[%c176, %c0_57], %49 {strides = array<i32>} : memref<200x320xf32, #tpu.memory_space<vmem>>, vector<8x320xf32>,
    %c0_58 = arith.constant 0 : index
    %c83 = arith.constant 83 : index
    %51 = vector.load %arg10[%c0_58, %c83] : memref<8x420xf32, #tpu.memory_space<vmem>>, vector<8x320xf32>
    %c184 = arith.constant 184 : index
    %c0_59 = arith.constant 0 : index
    %52 = vector.load %arg11[%c184, %c0_59] : memref<200x320xf32, #tpu.memory_space<vmem>>, vector<8x320xf32>
    tpu.vector_store %arg11[%c184, %c0_59], %51 {strides = array<i32>} : memref<200x320xf32, #tpu.memory_space<vmem>>, vector<8x320xf32>,
    %c0_60 = arith.constant 0 : index
    %c84 = arith.constant 84 : index
    %53 = vector.load %arg10[%c0_60, %c84] : memref<8x420xf32, #tpu.memory_space<vmem>>, vector<8x320xf32>
    %c192 = arith.constant 192 : index
    %c0_61 = arith.constant 0 : index
    %54 = vector.load %arg11[%c192, %c0_61] : memref<200x320xf32, #tpu.memory_space<vmem>>, vector<8x320xf32>
    tpu.vector_store %arg11[%c192, %c0_61], %53 {strides = array<i32>} : memref<200x320xf32, #tpu.memory_space<vmem>>, vector<8x320xf32>,
    %c0_62 = arith.constant 0 : index
    %c0_63 = arith.constant 0 : index
    %55 = vector.load %arg3[%c0_62, %c0_63] : memref<8x200xf32, #tpu.memory_space<vmem>>, vector<8x200xf32>
    %c0_64 = arith.constant 0 : index
    %c0_65 = arith.constant 0 : index
    %56 = vector.load %arg11[%c0_64, %c0_65] : memref<200x320xf32, #tpu.memory_space<vmem>>, vector<200x320xf32>
    %cst_66 = arith.constant dense<0.000000e+00> : vector<8x320xf32>
    %57 = tpu.matmul %55, %56, %cst_66 {dimension_numbers = #tpu.dot_dimension_numbers<[1], [0], [0], [1], [0, 0, 1, 1], [], []>} : vector<8x200xf32>, vector<200x320xf32>, vector<8x320xf32> -> vector<8x320xf32>
    %c0_67 = arith.constant 0 : index
    %c0_68 = arith.constant 0 : index
    %58 = vector.load %arg4[%c0_67, %c0_68] : memref<8x1xf32, #tpu.memory_space<vmem>>, vector<8x1xf32>
    %59 = vector.broadcast %58 : vector<8x1xf32> to vector<8x320xf32>
    %60 = arith.mulf %57, %59 : vector<8x320xf32>
    %c0_69 = arith.constant 0 : index
    %c0_70 = arith.constant 0 : index
    %61 = vector.load %arg5[%c0_69, %c0_70] : memref<8x1xf32, #tpu.memory_space<vmem>>, vector<8x1xf32>
    %62 = vector.broadcast %61 : vector<8x1xf32> to vector<8x320xf32>
    %63 = arith.addf %60, %62 : vector<8x320xf32>
    %c0_71 = arith.constant 0 : index
    %c0_72 = arith.constant 0 : index
    %64 = vector.load %arg8[%c0_71, %c0_72] : memref<1x420xf32, #tpu.memory_space<vmem>>, vector<1x320xf32>
    %65 = vector.broadcast %64 : vector<1x320xf32> to vector<8x320xf32>
    %66 = arith.mulf %63, %65 : vector<8x320xf32>
    %c0_73 = arith.constant 0 : index
    %c0_74 = arith.constant 0 : index
    %c0_75 = arith.constant 0 : index
    %67 = vector.load %arg9[%c0_73, %c0_74, %c0_75] : memref<1x8x320xf32, #tpu.memory_space<vmem>>, vector<1x8x320xf32>
    %68 = vector.shape_cast %67 : vector<1x8x320xf32> to vector<8x320xf32>
    %69 = vector.shape_cast %66 : vector<8x320xf32> to vector<1x8x320xf32>
    tpu.vector_store %arg9[%c0_73, %c0_74, %c0_75], %69 {strides = array<i32>} : memref<1x8x320xf32, #tpu.memory_space<vmem>>, vector<1x8x320xf32>,
    return
  }
  func.func @transform_0(%arg0: i32, %arg1: i32) -> (i32, i32, i32) {
    %c0_i32 = arith.constant 0 : i32
    %c0_i32_0 = arith.constant 0 : i32
    %c0_i32_1 = arith.constant 0 : i32
    return %arg0, %c0_i32, %c0_i32_0 : i32, i32, i32
  }
  func.func @transform_1(%arg0: i32, %arg1: i32) -> (i32, i32) {
    %c0_i32 = arith.constant 0 : i32
    %c0_i32_0 = arith.constant 0 : i32
    %c0_i32_1 = arith.constant 0 : i32
    return %c0_i32, %c0_i32_0 : i32, i32
  }
  func.func @transform_2(%arg0: i32, %arg1: i32) -> (i32, i32) {
    %c0_i32 = arith.constant 0 : i32
    %c0_i32_0 = arith.constant 0 : i32
    %c0_i32_1 = arith.constant 0 : i32
    return %c0_i32, %c0_i32_0 : i32, i32
  }
  func.func @transform_3(%arg0: i32, %arg1: i32) -> (i32, i32) {
    %c0_i32 = arith.constant 0 : i32
    %c0_i32_0 = arith.constant 0 : i32
    %c0_i32_1 = arith.constant 0 : i32
    return %c0_i32, %c0_i32_0 : i32, i32
  }
  func.func @transform_4(%arg0: i32, %arg1: i32) -> (i32, i32) {
    %c0_i32 = arith.constant 0 : i32
    %c0_i32_0 = arith.constant 0 : i32
    %c0_i32_1 = arith.constant 0 : i32
    return %c0_i32, %c0_i32_0 : i32, i32
  }
  func.func @transform_5(%arg0: i32, %arg1: i32) -> (i32, i32) {
    %c0_i32 = arith.constant 0 : i32
    %c0_i32_0 = arith.constant 0 : i32
    %c0_i32_1 = arith.constant 0 : i32
    return %c0_i32, %c0_i32_0 : i32, i32
  }
  func.func @transform_6(%arg0: i32, %arg1: i32) -> (i32, i32) {
    %c0_i32 = arith.constant 0 : i32
    %c0_i32_0 = arith.constant 0 : i32
    %c0_i32_1 = arith.constant 0 : i32
    return %c0_i32, %c0_i32_0 : i32, i32
  }
  func.func @transform_7(%arg0: i32, %arg1: i32) -> (i32, i32, i32) {
    %c0_i32 = arith.constant 0 : i32
    %c0_i32_0 = arith.constant 0 : i32
    return %arg0, %c0_i32, %arg1 : i32, i32, i32
  }
}

</mosaic_0001>

<llo_original>
// kernel: inconv_fwd.3
$region0: #{inconv_fwd.3}
  #allocation0 [shape = 'u32[]', space=smem, size = 0x4, offset = 0x4, fixed_abs, tag = 'smem constant byte address 0x4 - core index']
  #allocation1 [shape = 'u32[144,128]{1,0:T(1,128)}', space=vmem, size = 0x12000, scoped, tag = 'internal scratch']
  #allocation2 [shape = 'f32[8,420]{1,0:T(8,128)}', space=vmem, size = 0x4000, scoped, tag = 'scratch operand']
  #allocation3 [shape = 'f32[200,320]{1,0:T(8,128)}', space=vmem, size = 0x4b000, scoped, tag = 'scratch operand']
  %s0 = inlined_call_operand.vmem [shape: f32[2,8,320], index: 0, kind: input, shape index: {}]
  %s1 = inlined_call_operand.vmem [shape: f32[8,200], index: 1, kind: input, shape index: {}]
  %s2 = inlined_call_operand.vmem [shape: f32[8,1], index: 2, kind: input, shape index: {}, may-alias: {2,4}]
  %s3 = inlined_call_operand.vmem [shape: f32[8,1], index: 3, kind: input, shape index: {}]
  %s4 = inlined_call_operand.vmem [shape: f32[8,1], index: 4, kind: input, shape index: {}, may-alias: {2,4}]
  %s5 = inlined_call_operand.vmem [shape: f32[8,1], index: 5, kind: input, shape index: {}]
  %s6 = inlined_call_operand.vmem [shape: f32[1,420], index: 6, kind: input, shape index: {}]
  %s7 = inlined_call_operand.vmem [shape: f32[2,8,320], index: 7, kind: output, shape index: {}]
  %s8 = sld [smem:[#allocation0]]
  $region61: #{inconv_fwd.3} parent=0
    _
  %s10 = ssub.s32 1, %s8
  %s11 = scalar_select 0, %s10, %s8
  loop: start=0, step=1, limit=4
  $region2: #{inconv_fwd.3} parent=0 // loop_pre_header
    _
  $region3: #{inconv_fwd.3} parent=0 // loop_header
    %s13 = sphi 0, %s17
    %p14 = scmp.ge.s32.totalorder %s13, 4
    %s20 = sphi 0, %s32
    %s21 = sphi 0, %s28
    %s22 = sphi 0, %s20
    %s23 = sphi 0, %s21
    %s24 = sphi 0, %s22
    %s25 = sphi 0, %s23
    %s35 = sphi 0, %s37
    %s38 = sphi 0, %s35
    %s39 = sphi 0, %s38
    %s55 = sphi 0, %s39
    %s59 = sphi 0, %s59
    %s61 = sphi 0, %s59
    %s62 = sphi 0, %s61
    %s76 = sphi 0, %s62
    %s80 = sphi 0, %s80
    %s82 = sphi 0, %s80
    %s83 = sphi 0, %s82
    %s97 = sphi 0, %s83
    %s101 = sphi 0, %s101
    %s103 = sphi 0, %s101
    %s104 = sphi 0, %s103
    %s118 = sphi 0, %s104
    %s122 = sphi 0, %s122
    %s124 = sphi 0, %s122
    %s125 = sphi 0, %s124
    %s139 = sphi 0, %s125
    %s143 = sphi 0, %s143
    %s145 = sphi 0, %s143
    %s146 = sphi 0, %s145
    %s160 = sphi 0, %s146
    %s164 = sphi 0, %s164
    %s166 = sphi 0, %s164
    %s167 = sphi 0, %s166
    %s181 = sphi 0, %s167
    %s189 = sphi 0, %s191
    %s192 = sphi 0, %s189
    %s193 = sphi 0, %s192
    %s209 = sphi 0, %s193
  $region4: #{inconv_fwd.3} parent=0 // loop_header_branch
    %16 = sbr.rel (%p14) target = $region8
  $region5: #{inconv_fwd.3} parent=0 // loop_body
    %s18 = ssub.s32 %s13, 1
    %s19 = ssub.s32 %s13, 2
    %s26 = sadd.s32 1, %s21
    %p27 = scmp.ge.s32.totalorder %s26, 1
    %s28 = scalar_select %p27, 0, %s26
    %s29 = sadd.s32 1, %s20
    %s30 = scalar_select %p27, %s29, %s20
    %p31 = scmp.ge.s32.totalorder %s30, 2
    %s32 = scalar_select %p31, 0, %s30
    %s33 = ssub.s32 %s20, %s32
    %p34 = scmp.eq.s32.totalorder %s33, 0
    %s36 = sadd.s32 %s35, 1
    %s37 = scalar_select %p34, %s35, %s36
    %p40 = pneg %p34
    %p41 = scmp.eq.s32.totalorder %s13, 1
    %p42 = por %p40, %p41
    %p43 = scmp.ne.s32.totalorder %s35, %s38
    %p44 = scmp.eq.s32.totalorder %s13, 0
    %p45 = por %p43, %p44
    %p46 = scmp.ne.s32.totalorder %s35, %s38
    %p47 = scmp.eq.s32.totalorder %s18, 1
    %p48 = por %p46, %p47
    %p49 = scmp.ne.s32.totalorder %s38, %s39
    %p50 = scmp.eq.s32.totalorder %s18, 0
    %p51 = por %p49, %p50
    %p52 = scmp.ne.s32.totalorder %s38, %s39
    %p53 = scmp.eq.s32.totalorder %s19, 1
    %p54 = por %p52, %p53
    %p56 = scmp.ne.s32.totalorder %s39, %s55
    %p57 = scmp.eq.s32.totalorder %s19, 0
    %p58 = por %p56, %p57
    %s60 = sadd.s32 %s59, 1
    %p63 = scmp.eq.s32.totalorder %s13, 1
    %p64 = scmp.ne.s32.totalorder %s59, %s61
    %p65 = scmp.eq.s32.totalorder %s13, 0
    %p66 = por %p64, %p65
    %p67 = scmp.ne.s32.totalorder %s59, %s61
    %p68 = scmp.eq.s32.totalorder %s18, 1
    %p69 = por %p67, %p68
    %p70 = scmp.ne.s32.totalorder %s61, %s62
    %p71 = scmp.eq.s32.totalorder %s18, 0
    %p72 = por %p70, %p71
    %p73 = scmp.ne.s32.totalorder %s61, %s62
    %p74 = scmp.eq.s32.totalorder %s19, 1
    %p75 = por %p73, %p74
    %p77 = scmp.ne.s32.totalorder %s62, %s76
    %p78 = scmp.eq.s32.totalorder %s19, 0
    %p79 = por %p77, %p78
    %s81 = sadd.s32 %s80, 1
    %p84 = scmp.eq.s32.totalorder %s13, 1
    %p85 = scmp.ne.s32.totalorder %s80, %s82
    %p86 = scmp.eq.s32.totalorder %s13, 0
    %p87 = por %p85, %p86
    %p88 = scmp.ne.s32.totalorder %s80, %s82
    %p89 = scmp.eq.s32.totalorder %s18, 1
    %p90 = por %p88, %p89
    %p91 = scmp.ne.s32.totalorder %s82, %s83
    %p92 = scmp.eq.s32.totalorder %s18, 0
    %p93 = por %p91, %p92
    %p94 = scmp.ne.s32.totalorder %s82, %s83
    %p95 = scmp.eq.s32.totalorder %s19, 1
    %p96 = por %p94, %p95
    %p98 = scmp.ne.s32.totalorder %s83, %s97
    %p99 = scmp.eq.s32.totalorder %s19, 0
    %p100 = por %p98, %p99
    %s102 = sadd.s32 %s101, 1
    %p105 = scmp.eq.s32.totalorder %s13, 1
    %p106 = scmp.ne.s32.totalorder %s101, %s103
    %p107 = scmp.eq.s32.totalorder %s13, 0
    %p108 = por %p106, %p107
    %p109 = scmp.ne.s32.totalorder %s101, %s103
    %p110 = scmp.eq.s32.totalorder %s18, 1
    %p111 = por %p109, %p110
    %p112 = scmp.ne.s32.totalorder %s103, %s104
    %p113 = scmp.eq.s32.totalorder %s18, 0
    %p114 = por %p112, %p113
    %p115 = scmp.ne.s32.totalorder %s103, %s104
    %p116 = scmp.eq.s32.totalorder %s19, 1
    %p117 = por %p115, %p116
    %p119 = scmp.ne.s32.totalorder %s104, %s118
    %p120 = scmp.eq.s32.totalorder %s19, 0
    %p121 = por %p119, %p120
    %s123 = sadd.s32 %s122, 1
    %p126 = scmp.eq.s32.totalorder %s13, 1
    %p127 = scmp.ne.s32.totalorder %s122, %s124
    %p128 = scmp.eq.s32.totalorder %s13, 0
    %p129 = por %p127, %p128
    %p130 = scmp.ne.s32.totalorder %s122, %s124
    %p131 = scmp.eq.s32.totalorder %s18, 1
    %p132 = por %p130, %p131
    %p133 = scmp.ne.s32.totalorder %s124, %s125
    %p134 = scmp.eq.s32.totalorder %s18, 0
    %p135 = por %p133, %p134
    %p136 = scmp.ne.s32.totalorder %s124, %s125
    %p137 = scmp.eq.s32.totalorder %s19, 1
    %p138 = por %p136, %p137
    %p140 = scmp.ne.s32.totalorder %s125, %s139
    %p141 = scmp.eq.s32.totalorder %s19, 0
    %p142 = por %p140, %p141
    %s144 = sadd.s32 %s143, 1
    %p147 = scmp.eq.s32.totalorder %s13, 1
    %p148 = scmp.ne.s32.totalorder %s143, %s145
    %p149 = scmp.eq.s32.totalorder %s13, 0
    %p150 = por %p148, %p149
    %p151 = scmp.ne.s32.totalorder %s143, %s145
    %p152 = scmp.eq.s32.totalorder %s18, 1
    %p153 = por %p151, %p152
    %p154 = scmp.ne.s32.totalorder %s145, %s146
    %p155 = scmp.eq.s32.totalorder %s18, 0
    %p156 = por %p154, %p155
    %p157 = scmp.ne.s32.totalorder %s145, %s146
    %p158 = scmp.eq.s32.totalorder %s19, 1
    %p159 = por %p157, %p158
    %p161 = scmp.ne.s32.totalorder %s146, %s160
    %p162 = scmp.eq.s32.totalorder %s19, 0
    %p163 = por %p161, %p162
    %s165 = sadd.s32 %s164, 1
    %p168 = scmp.eq.s32.totalorder %s13, 1
    %p169 = scmp.ne.s32.totalorder %s164, %s166
    %p170 = scmp.eq.s32.totalorder %s13, 0
    %p171 = por %p169, %p170
    %p172 = scmp.ne.s32.totalorder %s164, %s166
    %p173 = scmp.eq.s32.totalorder %s18, 1
    %p174 = por %p172, %p173
    %p175 = scmp.ne.s32.totalorder %s166, %s167
    %p176 = scmp.eq.s32.totalorder %s18, 0
    %p177 = por %p175, %p176
    %p178 = scmp.ne.s32.totalorder %s166, %s167
    %p179 = scmp.eq.s32.totalorder %s19, 1
    %p180 = por %p178, %p179
    %p182 = scmp.ne.s32.totalorder %s167, %s181
    %p183 = scmp.eq.s32.totalorder %s19, 0
    %p184 = por %p182, %p183
    %s185 = ssub.s32 %s20, %s32
    %s186 = ssub.s32 %s21, %s28
    %s187 = sor.u32 %s185, %s186
    %p188 = scmp.eq.s32.totalorder %s187, 0
    %s190 = sadd.s32 %s189, 1
    %s191 = scalar_select %p188, %s189, %s190
    %p194 = pneg %p188
    %p195 = scmp.eq.s32.totalorder %s13, 1
    %p196 = por %p194, %p195
    %p197 = scmp.ne.s32.totalorder %s189, %s192
    %p198 = scmp.eq.s32.totalorder %s13, 0
    %p199 = por %p197, %p198
    %p200 = scmp.ne.s32.totalorder %s189, %s192
    %p201 = scmp.eq.s32.totalorder %s18, 1
    %p202 = por %p200, %p201
    %p203 = scmp.ne.s32.totalorder %s192, %s193
    %p204 = scmp.eq.s32.totalorder %s18, 0
    %p205 = por %p203, %p204
    %p206 = scmp.ne.s32.totalorder %s192, %s193
    %p207 = scmp.eq.s32.totalorder %s19, 1
    %p208 = por %p206, %p207
    %p210 = scmp.ne.s32.totalorder %s193, %s209
    %p211 = scmp.eq.s32.totalorder %s19, 0
    %p212 = por %p210, %p211
    %p213 = scmp.le.s32.totalorder 1, %s13
    %p214 = scmp.lt.s32.totalorder %s13, 3
    %p215 = pnand %p213, %p214
    %p216 = pneg %p215
    // Predicated region
    $region9: #{inconv_fwd.3} parent=5 // pred_check
      _
    $region10: #{inconv_fwd.3} parent=5 // pred_check_branch
      %218 = sbr.rel (%p215) target = $region12
    $region11: #{inconv_fwd.3} parent=5 // pred_region
      %s219 = ssub.s32 %s13, 1
      // Predicated region
      $region13: #{inconv_fwd.3} parent=11 // pred_check
        %p220 = pneg %p72
      $region14: #{inconv_fwd.3} parent=11 // pred_check_branch
        %222 = sbr.rel (%p220) target = $region16
      $region15: #{inconv_fwd.3} parent=11 // pred_region
        _
      $region16: #{inconv_fwd.3} parent=11 // pred_fallthru
        _
      // Predicated region
      $region17: #{inconv_fwd.3} parent=11 // pred_check
        %p223 = pneg %p93
      $region18: #{inconv_fwd.3} parent=11 // pred_check_branch
        %225 = sbr.rel (%p223) target = $region20
      $region19: #{inconv_fwd.3} parent=11 // pred_region
        _
      $region20: #{inconv_fwd.3} parent=11 // pred_fallthru
        _
      // Predicated region
      $region21: #{inconv_fwd.3} parent=11 // pred_check
        %p226 = pneg %p114
      $region22: #{inconv_fwd.3} parent=11 // pred_check_branch
        %228 = sbr.rel (%p226) target = $region24
      $region23: #{inconv_fwd.3} parent=11 // pred_region
        _
      $region24: #{inconv_fwd.3} parent=11 // pred_fallthru
        _
      // Predicated region
      $region25: #{inconv_fwd.3} parent=11 // pred_check
        %p229 = pneg %p135
      $region26: #{inconv_fwd.3} parent=11 // pred_check_branch
        %231 = sbr.rel (%p229) target = $region28
      $region27: #{inconv_fwd.3} parent=11 // pred_region
        _
      $region28: #{inconv_fwd.3} parent=11 // pred_fallthru
        _
      // Predicated region
      $region29: #{inconv_fwd.3} parent=11 // pred_check
        %p232 = pneg %p156
      $region30: #{inconv_fwd.3} parent=11 // pred_check_branch
        %234 = sbr.rel (%p232) target = $region32
      $region31: #{inconv_fwd.3} parent=11 // pred_region
        _
      $region32: #{inconv_fwd.3} parent=11 // pred_fallthru
        _
      // Predicated region
      $region33: #{inconv_fwd.3} parent=11 // pred_check
        %p235 = pneg %p177
      $region34: #{inconv_fwd.3} parent=11 // pred_check_branch
        %237 = sbr.rel (%p235) target = $region36
      $region35: #{inconv_fwd.3} parent=11 // pred_region
        _
      $region36: #{inconv_fwd.3} parent=11 // pred_fallthru
        _
    $region12: #{inconv_fwd.3} parent=5 // pred_fallthru
      _
    %p238 = scmp.lt.s32.totalorder %s13, 2
    // Predicated region
    $region37: #{inconv_fwd.3} parent=5 // pred_check
      %p239 = pneg %p238
    $region38: #{inconv_fwd.3} parent=5 // pred_check_branch
      %241 = sbr.rel (%p239) target = $region40
    $region39: #{inconv_fwd.3} parent=5 // pred_region
      // Predicated region
      $region41: #{inconv_fwd.3} parent=39 // pred_check
        %p242 = pneg %p45
      $region42: #{inconv_fwd.3} parent=39 // pred_check_branch
        %244 = sbr.rel (%p242) target = $region44
      $region43: #{inconv_fwd.3} parent=39 // pred_region
        %p245 = scmp.lt.s32.totalorder %s20, 1
        %s246 = scalar_select %p245, %s20, 1
        %s247 = smul.addr %s246, 3
        %s248 = smul.addr %s247, 8
        %s249 = scalar_lea.vmem %s0, %s248
      $region44: #{inconv_fwd.3} parent=39 // pred_fallthru
        _
    $region40: #{inconv_fwd.3} parent=5 // pred_fallthru
      _
    %p250 = scmp.le.s32.totalorder 1, %s13
    %p251 = scmp.lt.s32.totalorder %s13, 3
    %p252 = pnand %p250, %p251
    %p253 = pneg %p252
    // Predicated region
    $region45: #{inconv_fwd.3} parent=5 // pred_check
      _
    $region46: #{inconv_fwd.3} parent=5 // pred_check_branch
      %255 = sbr.rel (%p252) target = $region48
    $region47: #{inconv_fwd.3} parent=5 // pred_region
      %s256 = ssub.s32 %s13, 1
      %p257 = scmp.lt.s32.totalorder %s22, 1
      %s258 = scalar_select %p257, %s22, 1
      %s259 = smul.addr %s258, 3
      %s260 = smul.addr %s259, 8
      %s261 = scalar_lea.vmem %s0, %s260
      %p262 = pneg %p51
      %p263 = pneg %p48
      %p264 = pneg %p72
      %p265 = pneg %p69
      %p266 = pneg %p93
      %p267 = pneg %p90
      %p268 = pneg %p114
      %p269 = pneg %p111
      %p270 = pneg %p135
      %p271 = pneg %p132
      %p272 = pneg %p156
      %p273 = pneg %p153
      %p274 = pneg %p177
      %p275 = pneg %p174
      %p276 = pneg %p205
      %p277 = pneg %p202
      %s278 = smul.u32 3, %s23
      %p279 = scmp.lt.s32.totalorder %s22, 1
      %s280 = scalar_select %p279, %s22, 1
      %p281 = scmp.lt.s32.totalorder %s278, 2
      %s282 = scalar_select %p281, %s278, 2
      %s283 = smul.addr %s280, 3
      %s284 = sadd.s32 %s282, %s283
      %s285 = smul.addr %s284, 8
      %s286 = scalar_lea.vmem %s7, %s285
      %p287 = scmp.lt.s32.totalorder %s22, 1
      %s288 = scalar_select %p287, %s22, 1
      %s289 = smul.addr %s288, 3
      %s290 = smul.addr %s289, 8
      %s291 = scalar_lea.vmem %s0, %s290
      %s292 = smul.u32 3, %s23
      %p293 = scmp.lt.s32.totalorder %s22, 1
      %s294 = scalar_select %p293, %s22, 1
      %p295 = scmp.lt.s32.totalorder %s292, 2
      %s296 = scalar_select %p295, %s292, 2
      %s297 = smul.addr %s294, 3
      %s298 = sadd.s32 %s296, %s297
      %s299 = smul.addr %s298, 8
      %s300 = scalar_lea.vmem %s7, %s299
      %s301 = smul.u32 3, %s23
      %302 = vst [vmem:[#allocation2] sm:$0xff] 0.0
      %303 = vst [vmem:[#allocation2 + $0x8] sm:$0xff] 0.0
      %304 = vst [vmem:[#allocation2 + $0x10] sm:$0xff] 0.0
      %vm305 = vcmask 293888
      %306 = vst.msk [vmem:[#allocation2 + $0x18] sm:$0xff] %vm305, 0.0
      %v307 = vld [vmem:[%s291] sm:$0xff]
      %v308 = vld [vmem:[%s291 + $0x8] sm:$0xff]
      %v309 = vld [vmem:[%s291 + $0x10] sm:$0xff]
      %313 = vrot.lane.b32.xlu0 %v307, 42
      %v314 = vpop.permute.xlu0 %313
      %315 = vrot.lane.b32.xlu0 %v308, 42
      %v316 = vpop.permute.xlu0 %315
      %317 = vrot.lane.b32.xlu0 %v309, 42
      %v318 = vpop.permute.xlu0 %317
      %vm319 = vcmask 343040
      %v320 = vsel %vm319, %v314, %v316
      %v321 = vsel %vm319, %v316, %v318
      %vm325 = vcmask 1047888
      %326 = vst.msk [vmem:[#allocation2] sm:$0xff] %vm325, %v314
      %327 = vst [vmem:[#allocation2 + $0x8] sm:$0xff] %v320
      %vm328 = vcmask 867328
      %329 = vst.msk [vmem:[#allocation2 + $0x10] sm:$0xff] %vm328, %v321
      %v330 = vld [vmem:[#allocation2] sm:$0xff]
      %v331 = vld [vmem:[#allocation2 + $0x8] sm:$0xff]
      %v332 = vld [vmem:[#allocation2 + $0x10] sm:$0xff]
      %333 = vst [vmem:[#allocation3] sm:$0xff] %v330
      %334 = vst [vmem:[#allocation3 + $0x8] sm:$0xff] %v331
      %vm335 = vcmask 523264
      %336 = vst.msk [vmem:[#allocation3 + $0x10] sm:$0xff] %vm335, %v332
      %v337 = vld [vmem:[#allocation2] sm:$0xff]
      %v338 = vld [vmem:[#allocation2 + $0x8] sm:$0xff]
      %v339 = vld [vmem:[#allocation2 + $0x10] sm:$0xff]
      %343 = vrot.lane.b32.xlu0 %v337, 127
      %v344 = vpop.permute.xlu0 %343
      %345 = vrot.lane.b32.xlu0 %v338, 127
      %v346 = vpop.permute.xlu0 %345
      %347 = vrot.lane.b32.xlu0 %v339, 127
      %v348 = vpop.permute.xlu0 %347
      %vm349 = vcmask 1039360
      %v350 = vsel %vm349, %v344, %v346
      %v351 = vsel %vm349, %v346, %v348
      %355 = vst [vmem:[#allocation3 + $0x18] sm:$0xff] %v350
      %356 = vst [vmem:[#allocation3 + $0x20] sm:$0xff] %v351
      %357 = vst.msk [vmem:[#allocation3 + $0x28] sm:$0xff] %vm335, %v348
      %v358 = vld [vmem:[#allocation2] sm:$0xff]
      %v359 = vld [vmem:[#allocation2 + $0x8] sm:$0xff]
      %v360 = vld [vmem:[#allocation2 + $0x10] sm:$0xff]
      %364 = vrot.lane.b32.xlu0 %v358, 126
      %v365 = vpop.permute.xlu0 %364
      %366 = vrot.lane.b32.xlu0 %v359, 126
      %v367 = vpop.permute.xlu0 %366
      %368 = vrot.lane.b32.xlu0 %v360, 126
      %v369 = vpop.permute.xlu0 %368
      %vm370 = vcmask 1031168
      %v371 = vsel %vm370, %v365, %v367
      %v372 = vsel %vm370, %v367, %v369
      %376 = vst [vmem:[#allocation3 + $0x30] sm:$0xff] %v371
      %377 = vst [vmem:[#allocation3 + $0x38] sm:$0xff] %v372
      %378 = vst.msk [vmem:[#allocation3 + $0x40] sm:$0xff] %vm335, %v369
      %v379 = vld [vmem:[#allocation2] sm:$0xff]
      %v380 = vld [vmem:[#allocation2 + $0x8] sm:$0xff]
      %v381 = vld [vmem:[#allocation2 + $0x10] sm:$0xff]
      %385 = vrot.lane.b32.xlu0 %v379, 125
      %v386 = vpop.permute.xlu0 %385
      %387 = vrot.lane.b32.xlu0 %v380, 125
      %v388 = vpop.permute.xlu0 %387
      %389 = vrot.lane.b32.xlu0 %v381, 125
      %v390 = vpop.permute.xlu0 %389
      %vm391 = vcmask 1022976
      %v392 = vsel %vm391, %v386, %v388
      %v393 = vsel %vm391, %v388, %v390
      %397 = vst [vmem:[#allocation3 + $0x48] sm:$0xff] %v392
      %398 = vst [vmem:[#allocation3 + $0x50] sm:$0xff] %v393
      %399 = vst.msk [vmem:[#allocation3 + $0x58] sm:$0xff] %vm335, %v390
      %v400 = vld [vmem:[#allocation2] sm:$0xff]
      %v401 = vld [vmem:[#allocation2 + $0x8] sm:$0xff]
      %v402 = vld [vmem:[#allocation2 + $0x10] sm:$0xff]
      %406 = vrot.lane.b32.xlu0 %v400, 124
      %v407 = vpop.permute.xlu0 %406
      %408 = vrot.lane.b32.xlu0 %v401, 124
      %v409 = vpop.permute.xlu0 %408
      %410 = vrot.lane.b32.xlu0 %v402, 124
      %v411 = vpop.permute.xlu0 %410
      %vm412 = vcmask 1014784
      %v413 = vsel %vm412, %v407, %v409
      %v414 = vsel %vm412, %v409, %v411
      %418 = vst [vmem:[#allocation3 + $0x60] sm:$0xff] %v413
      %419 = vst [vmem:[#allocation3 + $0x68] sm:$0xff] %v414
      %420 = vst.msk [vmem:[#allocation3 + $0x70] sm:$0xff] %vm335, %v411
      %v421 = vld [vmem:[#allocation2] sm:$0xff]
      %v422 = vld [vmem:[#allocation2 + $0x8] sm:$0xff]
      %v423 = vld [vmem:[#allocation2 + $0x10] sm:$0xff]
      %427 = vrot.lane.b32.xlu0 %v421, 108
      %v428 = vpop.permute.xlu0 %427
      %429 = vrot.lane.b32.xlu0 %v422, 108
      %v430 = vpop.permute.xlu0 %429
      %431 = vrot.lane.b32.xlu0 %v423, 108
      %v432 = vpop.permute.xlu0 %431
      %vm433 = vcmask 883712
      %v434 = vsel %vm433, %v428, %v430
      %v435 = vsel %vm433, %v430, %v432
      %439 = vst [vmem:[#allocation3 + $0x78] sm:$0xff] %v434
      %440 = vst [vmem:[#allocation3 + $0x80] sm:$0xff] %v435
      %441 = vst.msk [vmem:[#allocation3 + $0x88] sm:$0xff] %vm335, %v432
      %v442 = vld [vmem:[#allocation2] sm:$0xff]
      %v443 = vld [vmem:[#allocation2 + $0x8] sm:$0xff]
      %v444 = vld [vmem:[#allocation2 + $0x10] sm:$0xff]
      %448 = vrot.lane.b32.xlu0 %v442, 107
      %v449 = vpop.permute.xlu0 %448
      %450 = vrot.lane.b32.xlu0 %v443, 107
      %v451 = vpop.permute.xlu0 %450
      %452 = vrot.lane.b32.xlu0 %v444, 107
      %v453 = vpop.permute.xlu0 %452
      %vm454 = vcmask 875520
      %v455 = vsel %vm454, %v449, %v451
      %v456 = vsel %vm454, %v451, %v453
      %460 = vst [vmem:[#allocation3 + $0x90] sm:$0xff] %v455
      %461 = vst [vmem:[#allocation3 + $0x98] sm:$0xff] %v456
      %462 = vst.msk [vmem:[#allocation3 + $0xa0] sm:$0xff] %vm335, %v453
      %v463 = vld [vmem:[#allocation2] sm:$0xff]
      %v464 = vld [vmem:[#allocation2 + $0x8] sm:$0xff]
      %v465 = vld [vmem:[#allocation2 + $0x10] sm:$0xff]
      %469 = vrot.lane.b32.xlu0 %v463, 106
      %v470 = vpop.permute.xlu0 %469
      %471 = vrot.lane.b32.xlu0 %v464, 106
      %v472 = vpop.permute.xlu0 %471
      %473 = vrot.lane.b32.xlu0 %v465, 106
      %v474 = vpop.permute.xlu0 %473
      %v475 = vsel %vm328, %v470, %v472
      %v476 = vsel %vm328, %v472, %v474
      %480 = vst [vmem:[#allocation3 + $0xa8] sm:$0xff] %v475
      %481 = vst [vmem:[#allocation3 + $0xb0] sm:$0xff] %v476
      %482 = vst.msk [vmem:[#allocation3 + $0xb8] sm:$0xff] %vm335, %v474
      %v483 = vld [vmem:[#allocation2] sm:$0xff]
      %v484 = vld [vmem:[#allocation2 + $0x8] sm:$0xff]
      %v485 = vld [vmem:[#allocation2 + $0x10] sm:$0xff]
      %489 = vrot.lane.b32.xlu0 %v483, 105
      %v490 = vpop.permute.xlu0 %489
      %491 = vrot.lane.b32.xlu0 %v484, 105
      %v492 = vpop.permute.xlu0 %491
      %493 = vrot.lane.b32.xlu0 %v485, 105
      %v494 = vpop.permute.xlu0 %493
      %vm495 = vcmask 859136
      %v496 = vsel %vm495, %v490, %v492
      %v497 = vsel %vm495, %v492, %v494
      %501 = vst [vmem:[#allocation3 + $0xc0] sm:$0xff] %v496
      %502 = vst [vmem:[#allocation3 + $0xc8] sm:$0xff] %v497
      %503 = vst.msk [vmem:[#allocation3 + $0xd0] sm:$0xff] %vm335, %v494
      %v504 = vld [vmem:[#allocation2] sm:$0xff]
      %v505 = vld [vmem:[#allocation2 + $0x8] sm:$0xff]
      %v506 = vld [vmem:[#allocation2 + $0x10] sm:$0xff]
      %510 = vrot.lane.b32.xlu0 %v504, 104
      %v511 = vpop.permute.xlu0 %510
      %512 = vrot.lane.b32.xlu0 %v505, 104
      %v513 = vpop.permute.xlu0 %512
      %514 = vrot.lane.b32.xlu0 %v506, 104
      %v515 = vpop.permute.xlu0 %514
      %vm516 = vcmask 850944
      %v517 = vsel %vm516, %v511, %v513
      %v518 = vsel %vm516, %v513, %v515
      %522 = vst [vmem:[#allocation3 + $0xd8] sm:$0xff] %v517
      %523 = vst [vmem:[#allocation3 + $0xe0] sm:$0xff] %v518
      %524 = vst.msk [vmem:[#allocation3 + $0xe8] sm:$0xff] %vm335, %v515
      %v525 = vld [vmem:[#allocation2] sm:$0xff]
      %v526 = vld [vmem:[#allocation2 + $0x8] sm:$0xff]
      %v527 = vld [vmem:[#allocation2 + $0x10] sm:$0xff]
      %531 = vrot.lane.b32.xlu0 %v525, 88
      %v532 = vpop.permute.xlu0 %531
      %533 = vrot.lane.b32.xlu0 %v526, 88
      %v534 = vpop.permute.xlu0 %533
      %535 = vrot.lane.b32.xlu0 %v527, 88
      %v536 = vpop.permute.xlu0 %535
      %vm537 = vcmask 719872
      %v538 = vsel %vm537, %v532, %v534
      %v539 = vsel %vm537, %v534, %v536
      %543 = vst [vmem:[#allocation3 + $0xf0] sm:$0xff] %v538
      %544 = vst [vmem:[#allocation3 + $0xf8] sm:$0xff] %v539
      %545 = vst.msk [vmem:[#allocation3 + $0x100] sm:$0xff] %vm335, %v536
      %v546 = vld [vmem:[#allocation2] sm:$0xff]
      %v547 = vld [vmem:[#allocation2 + $0x8] sm:$0xff]
      %v548 = vld [vmem:[#allocation2 + $0x10] sm:$0xff]
      %552 = vrot.lane.b32.xlu0 %v546, 87
      %v553 = vpop.permute.xlu0 %552
      %554 = vrot.lane.b32.xlu0 %v547, 87
      %v555 = vpop.permute.xlu0 %554
      %556 = vrot.lane.b32.xlu0 %v548, 87
      %v557 = vpop.permute.xlu0 %556
      %vm558 = vcmask 711680
      %v559 = vsel %vm558, %v553, %v555
      %v560 = vsel %vm558, %v555, %v557
      %564 = vst [vmem:[#allocation3 + $0x108] sm:$0xff] %v559
      %565 = vst [vmem:[#allocation3 + $0x110] sm:$0xff] %v560
      %566 = vst.msk [vmem:[#allocation3 + $0x118] sm:$0xff] %vm335, %v557
      %v567 = vld [vmem:[#allocation2] sm:$0xff]
      %v568 = vld [vmem:[#allocation2 + $0x8] sm:$0xff]
      %v569 = vld [vmem:[#allocation2 + $0x10] sm:$0xff]
      %573 = vrot.lane.b32.xlu0 %v567, 86
      %v574 = vpop.permute.xlu0 %573
      %575 = vrot.lane.b32.xlu0 %v568, 86
      %v576 = vpop.permute.xlu0 %575
      %577 = vrot.lane.b32.xlu0 %v569, 86
      %v578 = vpop.permute.xlu0 %577
      %vm579 = vcmask 703488
      %v580 = vsel %vm579, %v574, %v576
      %v581 = vsel %vm579, %v576, %v578
      %585 = vst [vmem:[#allocation3 + $0x120] sm:$0xff] %v580
      %586 = vst [vmem:[#allocation3 + $0x128] sm:$0xff] %v581
      %587 = vst.msk [vmem:[#allocation3 + $0x130] sm:$0xff] %vm335, %v578
      %v588 = vld [vmem:[#allocation2] sm:$0xff]
      %v589 = vld [vmem:[#allocation2 + $0x8] sm:$0xff]
      %v590 = vld [vmem:[#allocation2 + $0x10] sm:$0xff]
      %594 = vrot.lane.b32.xlu0 %v588, 85
      %v595 = vpop.permute.xlu0 %594
      %596 = vrot.lane.b32.xlu0 %v589, 85
      %v597 = vpop.permute.xlu0 %596
      %598 = vrot.lane.b32.xlu0 %v590, 85
      %v599 = vpop.permute.xlu0 %598
      %vm600 = vcmask 695296
      %v601 = vsel %vm600, %v595, %v597
      %v602 = vsel %vm600, %v597, %v599
      %606 = vst [vmem:[#allocation3 + $0x138] sm:$0xff] %v601
      %607 = vst [vmem:[#allocation3 + $0x140] sm:$0xff] %v602
      %608 = vst.msk [vmem:[#allocation3 + $0x148] sm:$0xff] %vm335, %v599
      %v609 = vld [vmem:[#allocation2] sm:$0xff]
      %v610 = vld [vmem:[#allocation2 + $0x8] sm:$0xff]
      %v611 = vld [vmem:[#allocation2 + $0x10] sm:$0xff]
      %615 = vrot.lane.b32.xlu0 %v609, 84
      %v616 = vpop.permute.xlu0 %615
      %617 = vrot.lane.b32.xlu0 %v610, 84
      %v618 = vpop.permute.xlu0 %617
      %619 = vrot.lane.b32.xlu0 %v611, 84
      %v620 = vpop.permute.xlu0 %619
      %vm621 = vcmask 687104
      %v622 = vsel %vm621, %v616, %v618
      %v623 = vsel %vm621, %v618, %v620
      %627 = vst [vmem:[#allocation3 + $0x150] sm:$0xff] %v622
      %628 = vst [vmem:[#allocation3 + $0x158] sm:$0xff] %v623
      %629 = vst.msk [vmem:[#allocation3 + $0x160] sm:$0xff] %vm335, %v620
      %v630 = vld [vmem:[#allocation2] sm:$0xff]
      %v631 = vld [vmem:[#allocation2 + $0x8] sm:$0xff]
      %v632 = vld [vmem:[#allocation2 + $0x10] sm:$0xff]
      %636 = vrot.lane.b32.xlu0 %v630, 68
      %v637 = vpop.permute.xlu0 %636
      %638 = vrot.lane.b32.xlu0 %v631, 68
      %v639 = vpop.permute.xlu0 %638
      %640 = vrot.lane.b32.xlu0 %v632, 68
      %v641 = vpop.permute.xlu0 %640
      %vm642 = vcmask 556032
      %v643 = vsel %vm642, %v637, %v639
      %v644 = vsel %vm642, %v639, %v641
      %648 = vst [vmem:[#allocation3 + $0x168] sm:$0xff] %v643
      %649 = vst [vmem:[#allocation3 + $0x170] sm:$0xff] %v644
      %650 = vst.msk [vmem:[#allocation3 + $0x178] sm:$0xff] %vm335, %v641
      %v651 = vld [vmem:[#allocation2] sm:$0xff]
      %v652 = vld [vmem:[#allocation2 + $0x8] sm:$0xff]
      %v653 = vld [vmem:[#allocation2 + $0x10] sm:$0xff]
      %657 = vrot.lane.b32.xlu0 %v651, 67
      %v658 = vpop.permute.xlu0 %657
      %659 = vrot.lane.b32.xlu0 %v652, 67
      %v660 = vpop.permute.xlu0 %659
      %661 = vrot.lane.b32.xlu0 %v653, 67
      %v662 = vpop.permute.xlu0 %661
      %vm663 = vcmask 547840
      %v664 = vsel %vm663, %v658, %v660
      %v665 = vsel %vm663, %v660, %v662
      %669 = vst [vmem:[#allocation3 + $0x180] sm:$0xff] %v664
      %670 = vst [vmem:[#allocation3 + $0x188] sm:$0xff] %v665
      %671 = vst.msk [vmem:[#allocation3 + $0x190] sm:$0xff] %vm335, %v662
      %v672 = vld [vmem:[#allocation2] sm:$0xff]
      %v673 = vld [vmem:[#allocation2 + $0x8] sm:$0xff]
      %v674 = vld [vmem:[#allocation2 + $0x10] sm:$0xff]
      %678 = vrot.lane.b32.xlu0 %v672, 66
      %v679 = vpop.permute.xlu0 %678
      %680 = vrot.lane.b32.xlu0 %v673, 66
      %v681 = vpop.permute.xlu0 %680
      %682 = vrot.lane.b32.xlu0 %v674, 66
      %v683 = vpop.permute.xlu0 %682
      %vm684 = vcmask 539648
      %v685 = vsel %vm684, %v679, %v681
      %v686 = vsel %vm684, %v681, %v683
      %690 = vst [vmem:[#allocation3 + $0x198] sm:$0xff] %v685
      %691 = vst [vmem:[#allocation3 + $0x1a0] sm:$0xff] %v686
      %692 = vst.msk [vmem:[#allocation3 + $0x1a8] sm:$0xff] %vm335, %v683
      %v693 = vld [vmem:[#allocation2] sm:$0xff]
      %v694 = vld [vmem:[#allocation2 + $0x8] sm:$0xff]
      %v695 = vld [vmem:[#allocation2 + $0x10] sm:$0xff]
      %699 = vrot.lane.b32.xlu0 %v693, 65
      %v700 = vpop.permute.xlu0 %699
      %701 = vrot.lane.b32.xlu0 %v694, 65
      %v702 = vpop.permute.xlu0 %701
      %703 = vrot.lane.b32.xlu0 %v695, 65
      %v704 = vpop.permute.xlu0 %703
      %vm705 = vcmask 531456
      %v706 = vsel %vm705, %v700, %v702
      %v707 = vsel %vm705, %v702, %v704
      %711 = vst [vmem:[#allocation3 + $0x1b0] sm:$0xff] %v706
      %712 = vst [vmem:[#allocation3 + $0x1b8] sm:$0xff] %v707
      %713 = vst.msk [vmem:[#allocation3 + $0x1c0] sm:$0xff] %vm335, %v704
      %v714 = vld [vmem:[#allocation2] sm:$0xff]
      %v715 = vld [vmem:[#allocation2 + $0x8] sm:$0xff]
      %v716 = vld [vmem:[#allocation2 + $0x10] sm:$0xff]
      %720 = vrot.lane.b32.xlu0 %v714, 64
      %v721 = vpop.permute.xlu0 %720
      %722 = vrot.lane.b32.xlu0 %v715, 64
      %v723 = vpop.permute.xlu0 %722
      %724 = vrot.lane.b32.xlu0 %v716, 64
      %v725 = vpop.permute.xlu0 %724
      %v726 = vsel %vm335, %v721, %v723
      %v727 = vsel %vm335, %v723, %v725
      %731 = vst [vmem:[#allocation3 + $0x1c8] sm:$0xff] %v726
      %732 = vst [vmem:[#allocation3 + $0x1d0] sm:$0xff] %v727
      %733 = vst.msk [vmem:[#allocation3 + $0x1d8] sm:$0xff] %vm335, %v725
      %v734 = vld [vmem:[#allocation2] sm:$0xff]
      %v735 = vld [vmem:[#allocation2 + $0x8] sm:$0xff]
      %v736 = vld [vmem:[#allocation2 + $0x10] sm:$0xff]
      %v737 = vld [vmem:[#allocation2 + $0x18] sm:$0xff]
      %742 = vrot.lane.b32.xlu0 %v734, 48
      %v743 = vpop.permute.xlu0 %742
      %744 = vrot.lane.b32.xlu0 %v735, 48
      %v745 = vpop.permute.xlu0 %744
      %746 = vrot.lane.b32.xlu0 %v736, 48
      %v747 = vpop.permute.xlu0 %746
      %748 = vrot.lane.b32.xlu0 %v737, 48
      %v749 = vpop.permute.xlu0 %748
      %vm750 = vcmask 392192
      %v751 = vsel %vm750, %v743, %v745
      %v752 = vsel %vm750, %v745, %v747
      %v753 = vsel %vm750, %v747, %v749
      %757 = vst [vmem:[#allocation3 + $0x1e0] sm:$0xff] %v751
      %758 = vst [vmem:[#allocation3 + $0x1e8] sm:$0xff] %v752
      %759 = vst.msk [vmem:[#allocation3 + $0x1f0] sm:$0xff] %vm335, %v753
      %v760 = vld [vmem:[#allocation2] sm:$0xff]
      %v761 = vld [vmem:[#allocation2 + $0x8] sm:$0xff]
      %v762 = vld [vmem:[#allocation2 + $0x10] sm:$0xff]
      %v763 = vld [vmem:[#allocation2 + $0x18] sm:$0xff]
      %768 = vrot.lane.b32.xlu0 %v760, 47
      %v769 = vpop.permute.xlu0 %768
      %770 = vrot.lane.b32.xlu0 %v761, 47
      %v771 = vpop.permute.xlu0 %770
      %772 = vrot.lane.b32.xlu0 %v762, 47
      %v773 = vpop.permute.xlu0 %772
      %774 = vrot.lane.b32.xlu0 %v763, 47
      %v775 = vpop.permute.xlu0 %774
      %vm776 = vcmask 384000
      %v777 = vsel %vm776, %v769, %v771
      %v778 = vsel %vm776, %v771, %v773
      %v779 = vsel %vm776, %v773, %v775
      %783 = vst [vmem:[#allocation3 + $0x1f8] sm:$0xff] %v777
      %784 = vst [vmem:[#allocation3 + $0x200] sm:$0xff] %v778
      %785 = vst.msk [vmem:[#allocation3 + $0x208] sm:$0xff] %vm335, %v779
      %v786 = vld [vmem:[#allocation2] sm:$0xff]
      %v787 = vld [vmem:[#allocation2 + $0x8] sm:$0xff]
      %v788 = vld [vmem:[#allocation2 + $0x10] sm:$0xff]
      %v789 = vld [vmem:[#allocation2 + $0x18] sm:$0xff]
      %794 = vrot.lane.b32.xlu0 %v786, 46
      %v795 = vpop.permute.xlu0 %794
      %796 = vrot.lane.b32.xlu0 %v787, 46
      %v797 = vpop.permute.xlu0 %796
      %798 = vrot.lane.b32.xlu0 %v788, 46
      %v799 = vpop.permute.xlu0 %798
      %800 = vrot.lane.b32.xlu0 %v789, 46
      %v801 = vpop.permute.xlu0 %800
      %vm802 = vcmask 375808
      %v803 = vsel %vm802, %v795, %v797
      %v804 = vsel %vm802, %v797, %v799
      %v805 = vsel %vm802, %v799, %v801
      %809 = vst [vmem:[#allocation3 + $0x210] sm:$0xff] %v803
      %810 = vst [vmem:[#allocation3 + $0x218] sm:$0xff] %v804
      %811 = vst.msk [vmem:[#allocation3 + $0x220] sm:$0xff] %vm335, %v805
      %v812 = vld [vmem:[#allocation2] sm:$0xff]
      %v813 = vld [vmem:[#allocation2 + $0x8] sm:$0xff]
      %v814 = vld [vmem:[#allocation2 + $0x10] sm:$0xff]
      %v815 = vld [vmem:[#allocation2 + $0x18] sm:$0xff]
      %820 = vrot.lane.b32.xlu0 %v812, 45
      %v821 = vpop.permute.xlu0 %820
      %822 = vrot.lane.b32.xlu0 %v813, 45
      %v823 = vpop.permute.xlu0 %822
      %824 = vrot.lane.b32.xlu0 %v814, 45
      %v825 = vpop.permute.xlu0 %824
      %826 = vrot.lane.b32.xlu0 %v815, 45
      %v827 = vpop.permute.xlu0 %826
      %vm828 = vcmask 367616
      %v829 = vsel %vm828, %v821, %v823
      %v830 = vsel %vm828, %v823, %v825
      %v831 = vsel %vm828, %v825, %v827
      %835 = vst [vmem:[#allocation3 + $0x228] sm:$0xff] %v829
      %836 = vst [vmem:[#allocation3 + $0x230] sm:$0xff] %v830
      %837 = vst.msk [vmem:[#allocation3 + $0x238] sm:$0xff] %vm335, %v831
      %v838 = vld [vmem:[#allocation2] sm:$0xff]
      %v839 = vld [vmem:[#allocation2 + $0x8] sm:$0xff]
      %v840 = vld [vmem:[#allocation2 + $0x10] sm:$0xff]
      %v841 = vld [vmem:[#allocation2 + $0x18] sm:$0xff]
      %846 = vrot.lane.b32.xlu0 %v838, 44
      %v847 = vpop.permute.xlu0 %846
      %848 = vrot.lane.b32.xlu0 %v839, 44
      %v849 = vpop.permute.xlu0 %848
      %850 = vrot.lane.b32.xlu0 %v840, 44
      %v851 = vpop.permute.xlu0 %850
      %852 = vrot.lane.b32.xlu0 %v841, 44
      %v853 = vpop.permute.xlu0 %852
      %vm854 = vcmask 359424
      %v855 = vsel %vm854, %v847, %v849
      %v856 = vsel %vm854, %v849, %v851
      %v857 = vsel %vm854, %v851, %v853
      %861 = vst [vmem:[#allocation3 + $0x240] sm:$0xff] %v855
      %862 = vst [vmem:[#allocation3 + $0x248] sm:$0xff] %v856
      %863 = vst.msk [vmem:[#allocation3 + $0x250] sm:$0xff] %vm335, %v857
      %v864 = vld [vmem:[%s1] sm:$0xff]
      %v865 = vld [vmem:[%s1 + $0x8] sm:$0xff]
      %v866 = vld [vmem:[#allocation3] sm:$0xff]
      %v867 = vld [vmem:[#allocation3 + $0x8] sm:$0xff]
      %v868 = vld [vmem:[#allocation3 + $0x10] sm:$0xff]
      %v869 = vld [vmem:[#allocation3 + $0x18] sm:$0xff]
      %v870 = vld [vmem:[#allocation3 + $0x20] sm:$0xff]
      %v871 = vld [vmem:[#allocation3 + $0x28] sm:$0xff]
      %v872 = vld [vmem:[#allocation3 + $0x30] sm:$0xff]
      %v873 = vld [vmem:[#allocation3 + $0x38] sm:$0xff]
      %v874 = vld [vmem:[#allocation3 + $0x40] sm:$0xff]
      %v875 = vld [vmem:[#allocation3 + $0x48] sm:$0xff]
      %v876 = vld [vmem:[#allocation3 + $0x50] sm:$0xff]
      %v877 = vld [vmem:[#allocation3 + $0x58] sm:$0xff]
      %v878 = vld [vmem:[#allocation3 + $0x60] sm:$0xff]
      %v879 = vld [vmem:[#allocation3 + $0x68] sm:$0xff]
      %v880 = vld [vmem:[#allocation3 + $0x70] sm:$0xff]
      %v881 = vld [vmem:[#allocation3 + $0x78] sm:$0xff]
      %v882 = vld [vmem:[#allocation3 + $0x80] sm:$0xff]
      %v883 = vld [vmem:[#allocation3 + $0x88] sm:$0xff]
      %v884 = vld [vmem:[#allocation3 + $0x90] sm:$0xff]
      %v885 = vld [vmem:[#allocation3 + $0x98] sm:$0xff]
      %v886 = vld [vmem:[#allocation3 + $0xa0] sm:$0xff]
      %v887 = vld [vmem:[#allocation3 + $0xa8] sm:$0xff]
      %v888 = vld [vmem:[#allocation3 + $0xb0] sm:$0xff]
      %v889 = vld [vmem:[#allocation3 + $0xb8] sm:$0xff]
      %v890 = vld [vmem:[#allocation3 + $0xc0] sm:$0xff]
      %v891 = vld [vmem:[#allocation3 + $0xc8] sm:$0xff]
      %v892 = vld [vmem:[#allocation3 + $0xd0] sm:$0xff]
      %v893 = vld [vmem:[#allocation3 + $0xd8] sm:$0xff]
      %v894 = vld [vmem:[#allocation3 + $0xe0] sm:$0xff]
      %v895 = vld [vmem:[#allocation3 + $0xe8] sm:$0xff]
      %v896 = vld [vmem:[#allocation3 + $0xf0] sm:$0xff]
      %v897 = vld [vmem:[#allocation3 + $0xf8] sm:$0xff]
      %v898 = vld [vmem:[#allocation3 + $0x100] sm:$0xff]
      %v899 = vld [vmem:[#allocation3 + $0x108] sm:$0xff]
      %v900 = vld [vmem:[#allocation3 + $0x110] sm:$0xff]
      %v901 = vld [vmem:[#allocation3 + $0x118] sm:$0xff]
      %v902 = vld [vmem:[#allocation3 + $0x120] sm:$0xff]
      %v903 = vld [vmem:[#allocation3 + $0x128] sm:$0xff]
      %v904 = vld [vmem:[#allocation3 + $0x130] sm:$0xff]
      %v905 = vld [vmem:[#allocation3 + $0x138] sm:$0xff]
      %v906 = vld [vmem:[#allocation3 + $0x140] sm:$0xff]
      %v907 = vld [vmem:[#allocation3 + $0x148] sm:$0xff]
      %v908 = vld [vmem:[#allocation3 + $0x150] sm:$0xff]
      %v909 = vld [vmem:[#allocation3 + $0x158] sm:$0xff]
      %v910 = vld [vmem:[#allocation3 + $0x160] sm:$0xff]
      %v911 = vld [vmem:[#allocation3 + $0x168] sm:$0xff]
      %v912 = vld [vmem:[#allocation3 + $0x170] sm:$0xff]
      %v913 = vld [vmem:[#allocation3 + $0x178] sm:$0xff]
      %v914 = vld [vmem:[#allocation3 + $0x180] sm:$0xff]
      %v915 = vld [vmem:[#allocation3 + $0x188] sm:$0xff]
      %v916 = vld [vmem:[#allocation3 + $0x190] sm:$0xff]
      %v917 = vld [vmem:[#allocation3 + $0x198] sm:$0xff]
      %v918 = vld [vmem:[#allocation3 + $0x1a0] sm:$0xff]
      %v919 = vld [vmem:[#allocation3 + $0x1a8] sm:$0xff]
      %v920 = vld [vmem:[#allocation3 + $0x1b0] sm:$0xff]
      %v921 = vld [vmem:[#allocation3 + $0x1b8] sm:$0xff]
      %v922 = vld [vmem:[#allocation3 + $0x1c0] sm:$0xff]
      %v923 = vld [vmem:[#allocation3 + $0x1c8] sm:$0xff]
      %v924 = vld [vmem:[#allocation3 + $0x1d0] sm:$0xff]
      %v925 = vld [vmem:[#allocation3 + $0x1d8] sm:$0xff]
      %v926 = vld [vmem:[#allocation3 + $0x1e0] sm:$0xff]
      %v927 = vld [vmem:[#allocation3 + $0x1e8] sm:$0xff]
      %v928 = vld [vmem:[#allocation3 + $0x1f0] sm:$0xff]
      %v929 = vld [vmem:[#allocation3 + $0x1f8] sm:$0xff]
      %v930 = vld [vmem:[#allocation3 + $0x200] sm:$0xff]
      %v931 = vld [vmem:[#allocation3 + $0x208] sm:$0xff]
      %v932 = vld [vmem:[#allocation3 + $0x210] sm:$0xff]
      %v933 = vld [vmem:[#allocation3 + $0x218] sm:$0xff]
      %v934 = vld [vmem:[#allocation3 + $0x220] sm:$0xff]
      %v935 = vld [vmem:[#allocation3 + $0x228] sm:$0xff]
      %v936 = vld [vmem:[#allocation3 + $0x230] sm:$0xff]
      %v937 = vld [vmem:[#allocation3 + $0x238] sm:$0xff]
      %v938 = vld [vmem:[#allocation3 + $0x240] sm:$0xff]
      %v939 = vld [vmem:[#allocation3 + $0x248] sm:$0xff]
      %v940 = vld [vmem:[#allocation3 + $0x250] sm:$0xff]
      %vm941 = vcmask 588800
      %v943 = vsel %vm941, %v865, 0
      %945 = vmatprep.subr.mxu0 %v867
      %946 = vmatpush1.msra.mxu0 %v866
      %947 = vmatprep.subr.mxu0 %v870
      %948 = vmatpush1.msra.mxu0 %v869
      %949 = vmatprep.subr.mxu0 %v873
      %950 = vmatpush1.msra.mxu0 %v872
      %951 = vmatprep.subr.mxu0 %v876
      %952 = vmatpush1.msra.mxu0 %v875
      %953 = vmatprep.subr.mxu0 %v879
      %954 = vmatpush1.msra.mxu0 %v878
      %955 = vmatprep.subr.mxu0 %v882
      %956 = vmatpush1.msra.mxu0 %v881
      %957 = vmatprep.subr.mxu0 %v885
      %958 = vmatpush1.msra.mxu0 %v884
      %959 = vmatprep.subr.mxu0 %v888
      %960 = vmatpush1.msra.mxu0 %v887
      %961 = vmatprep.subr.mxu0 %v891
      %962 = vmatpush1.msra.mxu0 %v890
      %963 = vmatprep.subr.mxu0 %v894
      %964 = vmatpush1.msra.mxu0 %v893
      %965 = vmatprep.subr.mxu0 %v897
      %966 = vmatpush1.msra.mxu0 %v896
      %967 = vmatprep.subr.mxu0 %v900
      %968 = vmatpush1.msra.mxu0 %v899
      %969 = vmatprep.subr.mxu0 %v903
      %970 = vmatpush1.msra.mxu0 %v902
      %971 = vmatprep.subr.mxu0 %v906
      %972 = vmatpush1.msra.mxu0 %v905
      %973 = vmatprep.subr.mxu0 %v909
      %974 = vmatpush1.msra.mxu0 %v908
      %975 = vmatprep.subr.mxu0 %v912
      %976 = vmatpush1.msra.mxu0 %v911
      %977 = vmatprep.subr.mxu0 %v915
      %978 = vmatpush1.msra.mxu0 %v914
      %979 = vmatprep.subr.mxu0 %v918
      %980 = vmatpush1.msra.mxu0 %v917
      %981 = vmatprep.subr.mxu0 %v921
      %982 = vmatpush1.msra.mxu0 %v920
      %983 = vmatprep.subr.mxu0 %v924
      %984 = vmatpush1.msra.mxu0 %v923
      %985 = vmatprep.subr.mxu0 %v927
      %986 = vmatpush1.msra.mxu0 %v926
      %987 = vmatprep.subr.mxu0 %v930
      %988 = vmatpush1.msra.mxu0 %v929
      %989 = vmatprep.subr.mxu0 %v933
      %990 = vmatpush1.msra.mxu0 %v932
      %991 = vmatprep.subr.mxu0 %v936
      %992 = vmatpush1.msra.mxu0 %v935
      %993 = vmatprep.subr.mxu0 %v939
      %994 = vmatpush1.msra.mxu0 %v938
      %995 = vmatprep.subr.mxu0 0.0
      %996 = vmatpush1.msra.mxu0 0.0
      %997 = vmatprep.subr.mxu0 0.0
      %998 = vmatpush1.msra.mxu0 0.0
      %999 = vmatprep.subr.mxu0 0.0
      %1000 = vmatpush1.msra.mxu0 0.0
      %1001 = vmatprep.subr.mxu0 0.0
      %1002 = vmatpush1.msra.mxu0 0.0
      %1003 = vmatprep.subr.mxu0 0.0
      %1004 = vmatpush1.msra.mxu0 0.0
      %1005 = vmatprep.subr.mxu0 0.0
      %1006 = vmatpush1.msra.mxu0 0.0
      %1007 = vmatprep.subr.mxu0 0.0
      %1008 = vmatpush1.msra.mxu0 0.0
      %1009 = vmatprep.mubr.f32.mxu0 %v943
      %1010 = vmatmul.mubr.f32.gmra.mrb[0].mxu0 %v864
      %v1011 = vpop.f32.mrb[0].mxu0
      %v1012 = vadd.f32 0.0, %v1011
      %v1013 = vpop.f32.mrb[0].mxu0
      %v1014 = vadd.f32 0.0, %v1013
      %1015 = vdwg.mxu0
      %1016 = vmatprep.subr.mxu0 0.0
      %1017 = vmatpush1.msra.mxu0 %v868
      %1018 = vmatprep.subr.mxu0 0.0
      %1019 = vmatpush1.msra.mxu0 %v871
      %1020 = vmatprep.subr.mxu0 0.0
      %1021 = vmatpush1.msra.mxu0 %v874
      %1022 = vmatprep.subr.mxu0 0.0
      %1023 = vmatpush1.msra.mxu0 %v877
      %1024 = vmatprep.subr.mxu0 0.0
      %1025 = vmatpush1.msra.mxu0 %v880
      %1026 = vmatprep.subr.mxu0 0.0
      %1027 = vmatpush1.msra.mxu0 %v883
      %1028 = vmatprep.subr.mxu0 0.0
      %1029 = vmatpush1.msra.mxu0 %v886
      %1030 = vmatprep.subr.mxu0 0.0
      %1031 = vmatpush1.msra.mxu0 %v889
      %1032 = vmatprep.subr.mxu0 0.0
      %1033 = vmatpush1.msra.mxu0 %v892
      %1034 = vmatprep.subr.mxu0 0.0
      %1035 = vmatpush1.msra.mxu0 %v895
      %1036 = vmatprep.subr.mxu0 0.0
      %1037 = vmatpush1.msra.mxu0 %v898
      %1038 = vmatprep.subr.mxu0 0.0
      %1039 = vmatpush1.msra.mxu0 %v901
      %1040 = vmatprep.subr.mxu0 0.0
      %1041 = vmatpush1.msra.mxu0 %v904
      %1042 = vmatprep.subr.mxu0 0.0
      %1043 = vmatpush1.msra.mxu0 %v907
      %1044 = vmatprep.subr.mxu0 0.0
      %1045 = vmatpush1.msra.mxu0 %v910
      %1046 = vmatprep.subr.mxu0 0.0
      %1047 = vmatpush1.msra.mxu0 %v913
      %1048 = vmatprep.subr.mxu0 0.0
      %1049 = vmatpush1.msra.mxu0 %v916
      %1050 = vmatprep.subr.mxu0 0.0
      %1051 = vmatpush1.msra.mxu0 %v919
      %1052 = vmatprep.subr.mxu0 0.0
      %1053 = vmatpush1.msra.mxu0 %v922
      %1054 = vmatprep.subr.mxu0 0.0
      %1055 = vmatpush1.msra.mxu0 %v925
      %1056 = vmatprep.subr.mxu0 0.0
      %1057 = vmatpush1.msra.mxu0 %v928
      %1058 = vmatprep.subr.mxu0 0.0
      %1059 = vmatpush1.msra.mxu0 %v931
      %1060 = vmatprep.subr.mxu0 0.0
      %1061 = vmatpush1.msra.mxu0 %v934
      %1062 = vmatprep.subr.mxu0 0.0
      %1063 = vmatpush1.msra.mxu0 %v937
      %1064 = vmatprep.subr.mxu0 0.0
      %1065 = vmatpush1.msra.mxu0 %v940
      %1066 = vmatprep.subr.mxu0 0.0
      %1067 = vmatpush1.msra.mxu0 0.0
      %1068 = vmatprep.subr.mxu0 0.0
      %1069 = vmatpush1.msra.mxu0 0.0
      %1070 = vmatprep.subr.mxu0 0.0
      %1071 = vmatpush1.msra.mxu0 0.0
      %1072 = vmatprep.subr.mxu0 0.0
      %1073 = vmatpush1.msra.mxu0 0.0
      %1074 = vmatprep.subr.mxu0 0.0
      %1075 = vmatpush1.msra.mxu0 0.0
      %1076 = vmatprep.subr.mxu0 0.0
      %1077 = vmatpush1.msra.mxu0 0.0
      %1078 = vmatprep.subr.mxu0 0.0
      %1079 = vmatpush1.msra.mxu0 0.0
      %1080 = vmatprep.mubr.f32.mxu0 %v943
      %1081 = vmatmul.mubr.f32.gmra.mrb[0].mxu0 %v864
      %v1082 = vpop.f32.mrb[0].mxu0
      %v1083 = vadd.f32 0.0, %v1082
      %v1084 = vpop.f32.mrb[0].mxu0
      %1085 = vdwg.mxu0
      %v1086 = vld [vmem:[%s2] sm:$0xff]
      %1088 = vset.pattern.permute.xlu0 0
      %1089 = vperm.xlu0 %1088, %v1086
      %v1090 = vpop.permute.xlu0 %1089
      %v1092 = vmul.f32 %v1012, %v1090
      %v1093 = vmul.f32 %v1014, %v1090
      %v1094 = vmul.f32 %v1083, %v1090
      %v1095 = vld [vmem:[%s3] sm:$0xff]
      %1097 = vset.pattern.permute.xlu0 0
      %1098 = vperm.xlu0 %1097, %v1095
      %v1099 = vpop.permute.xlu0 %1098
      %v1101 = vadd.f32 %v1092, %v1099
      %v1102 = vadd.f32 %v1093, %v1099
      %v1103 = vadd.f32 %v1094, %v1099
      %v1104 = vld [vmem:[%s6] sm:$0x7]
      %v1106 = vlaneseq
      %v1107 = vshrl.u32 %v1106, 7
      %v1108 = vsub.s32 0, %v1107
      %v1109 = vrot.slane %v1104, %v1108
      %v1110 = vlaneseq
      %v1111 = vshrl.u32 %v1110, 7
      %v1112 = vsub.s32 1, %v1111
      %v1113 = vrot.slane %v1104, %v1112
      %v1114 = vlaneseq
      %v1115 = vshrl.u32 %v1114, 7
      %v1116 = vsub.s32 2, %v1115
      %v1117 = vrot.slane %v1104, %v1116
      %v1121 = vmul.f32 %v1101, %v1109
      %v1122 = vmul.f32 %v1102, %v1113
      %v1123 = vmul.f32 %v1103, %v1117
      %1124 = vst [vmem:[%s300] sm:$0xff] %v1121
      %1125 = vst [vmem:[%s300 + $0x8] sm:$0xff] %v1122
      %1126 = vst.msk [vmem:[%s300 + $0x10] sm:$0xff] %vm335, %v1123
      %s1127 = smul.u32 3, %s23
      %p1128 = scmp.lt.s32.totalorder %s22, 1
      %s1129 = scalar_select %p1128, %s22, 1
      %p1130 = scmp.lt.s32.totalorder %s1127, 2
      %s1131 = scalar_select %p1130, %s1127, 2
      %s1132 = smul.addr %s1129, 3
      %s1133 = sadd.s32 %s1131, %s1132
      %s1134 = smul.addr %s1133, 8
      %s1135 = scalar_lea.vmem %s7, %s1134
      // Predicated region
      $region49: #{inconv_fwd.3} parent=47 // pred_check
        %p1136 = pneg %p202
      $region50: #{inconv_fwd.3} parent=47 // pred_check_branch
        %1138 = sbr.rel (%p1136) target = $region52
      $region51: #{inconv_fwd.3} parent=47 // pred_region
        %s1139 = smul.u32 3, %s23
      $region52: #{inconv_fwd.3} parent=47 // pred_fallthru
        _
    $region48: #{inconv_fwd.3} parent=5 // pred_fallthru
      _
    %p1140 = scmp.le.s32.totalorder 2, %s13
    // Predicated region
    $region53: #{inconv_fwd.3} parent=5 // pred_check
      %p1141 = pneg %p1140
    $region54: #{inconv_fwd.3} parent=5 // pred_check_branch
      %1143 = sbr.rel (%p1141) target = $region56
    $region55: #{inconv_fwd.3} parent=5 // pred_region
      %s1144 = ssub.s32 %s13, 2
      // Predicated region
      $region57: #{inconv_fwd.3} parent=55 // pred_check
        %p1145 = pneg %p208
      $region58: #{inconv_fwd.3} parent=55 // pred_check_branch
        %1147 = sbr.rel (%p1145) target = $region60
      $region59: #{inconv_fwd.3} parent=55 // pred_region
        %s1148 = smul.u32 3, %s25
        %p1149 = scmp.lt.s32.totalorder %s24, 1
        %s1150 = scalar_select %p1149, %s24, 1
        %p1151 = scmp.lt.s32.totalorder %s1148, 2
        %s1152 = scalar_select %p1151, %s1148, 2
        %s1153 = smul.addr %s1150, 3
        %s1154 = sadd.s32 %s1152, %s1153
        %s1155 = smul.addr %s1154, 8
        %s1156 = scalar_lea.vmem %s7, %s1155
      $region60: #{inconv_fwd.3} parent=55 // pred_fallthru
        _
    $region56: #{inconv_fwd.3} parent=5 // pred_fallthru
      _
  $region6: #{inconv_fwd.3} parent=0 // loop_footer
    %s17 = sadd.s32 1, %s13
  $region7: #{inconv_fwd.3} parent=0 // loop_footer_branch
    %12 = sbr.rel target = $region3
  $region8: #{inconv_fwd.3} parent=0 // loop_exit
    _

// kernel: inconv_fwd.2
$region0: #{inconv_fwd.2}
  #allocation0 [shape = 'u32[]', space=smem, size = 0x4, offset = 0x4, fixed_abs, tag = 'smem constant byte address 0x4 - core index']
  #allocation1 [shape = 'u32[144,128]{1,0:T(1,128)}', space=vmem, size = 0x12000, scoped, tag = 'internal scratch']
  #allocation2 [shape = 'f32[8,420]{1,0:T(8,128)}', space=vmem, size = 0x4000, scoped, tag = 'scratch operand']
  #allocation3 [shape = 'f32[200,320]{1,0:T(8,128)}', space=vmem, size = 0x4b000, scoped, tag = 'scratch operand']
  %s0 = inlined_call_operand.vmem [shape: f32[2,8,320], index: 0, kind: input, shape index: {}]
  %s1 = inlined_call_operand.vmem [shape: f32[8,200], index: 1, kind: input, shape index: {}]
  %s2 = inlined_call_operand.vmem [shape: f32[8,1], index: 2, kind: input, shape index: {}]
  %s3 = inlined_call_operand.vmem [shape: f32[8,1], index: 3, kind: input, shape index: {}]
  %s4 = inlined_call_operand.vmem [shape: f32[8,1], index: 4, kind: input, shape index: {}]
  %s5 = inlined_call_operand.vmem [shape: f32[8,1], index: 5, kind: input, shape index: {}]
  %s6 = inlined_call_operand.vmem [shape: f32[1,420], index: 6, kind: input, shape index: {}]
  %s7 = inlined_call_operand.vmem [shape: f32[2,8,320], index: 7, kind: output, shape index: {}]
  %s8 = sld [smem:[#allocation0]]
  $region61: #{inconv_fwd.2} parent=0
    _
  %s10 = ssub.s32 1, %s8
  %s11 = scalar_select 0, %s10, %s8
  loop: start=0, step=1, limit=4
  $region2: #{inconv_fwd.2} parent=0 // loop_pre_header
    _
  $region3: #{inconv_fwd.2} parent=0 // loop_header
    %s13 = sphi 0, %s17
    %p14 = scmp.ge.s32.totalorder %s13, 4
    %s20 = sphi 0, %s32
    %s21 = sphi 0, %s28
    %s22 = sphi 0, %s20
    %s23 = sphi 0, %s21
    %s24 = sphi 0, %s22
    %s25 = sphi 0, %s23
    %s35 = sphi 0, %s37
    %s38 = sphi 0, %s35
    %s39 = sphi 0, %s38
    %s55 = sphi 0, %s39
    %s59 = sphi 0, %s59
    %s61 = sphi 0, %s59
    %s62 = sphi 0, %s61
    %s76 = sphi 0, %s62
    %s80 = sphi 0, %s80
    %s82 = sphi 0, %s80
    %s83 = sphi 0, %s82
    %s97 = sphi 0, %s83
    %s101 = sphi 0, %s101
    %s103 = sphi 0, %s101
    %s104 = sphi 0, %s103
    %s118 = sphi 0, %s104
    %s122 = sphi 0, %s122
    %s124 = sphi 0, %s122
    %s125 = sphi 0, %s124
    %s139 = sphi 0, %s125
    %s143 = sphi 0, %s143
    %s145 = sphi 0, %s143
    %s146 = sphi 0, %s145
    %s160 = sphi 0, %s146
    %s164 = sphi 0, %s164
    %s166 = sphi 0, %s164
    %s167 = sphi 0, %s166
    %s181 = sphi 0, %s167
    %s189 = sphi 0, %s191
    %s192 = sphi 0, %s189
    %s193 = sphi 0, %s192
    %s209 = sphi 0, %s193
  $region4: #{inconv_fwd.2} parent=0 // loop_header_branch
    %16 = sbr.rel (%p14) target = $region8
  $region5: #{inconv_fwd.2} parent=0 // loop_body
    %s18 = ssub.s32 %s13, 1
    %s19 = ssub.s32 %s13, 2
    %s26 = sadd.s32 1, %s21
    %p27 = scmp.ge.s32.totalorder %s26, 1
    %s28 = scalar_select %p27, 0, %s26
    %s29 = sadd.s32 1, %s20
    %s30 = scalar_select %p27, %s29, %s20
    %p31 = scmp.ge.s32.totalorder %s30, 2
    %s32 = scalar_select %p31, 0, %s30
    %s33 = ssub.s32 %s20, %s32
    %p34 = scmp.eq.s32.totalorder %s33, 0
    %s36 = sadd.s32 %s35, 1
    %s37 = scalar_select %p34, %s35, %s36
    %p40 = pneg %p34
    %p41 = scmp.eq.s32.totalorder %s13, 1
    %p42 = por %p40, %p41
    %p43 = scmp.ne.s32.totalorder %s35, %s38
    %p44 = scmp.eq.s32.totalorder %s13, 0
    %p45 = por %p43, %p44
    %p46 = scmp.ne.s32.totalorder %s35, %s38
    %p47 = scmp.eq.s32.totalorder %s18, 1
    %p48 = por %p46, %p47
    %p49 = scmp.ne.s32.totalorder %s38, %s39
    %p50 = scmp.eq.s32.totalorder %s18, 0
    %p51 = por %p49, %p50
    %p52 = scmp.ne.s32.totalorder %s38, %s39
    %p53 = scmp.eq.s32.totalorder %s19, 1
    %p54 = por %p52, %p53
    %p56 = scmp.ne.s32.totalorder %s39, %s55
    %p57 = scmp.eq.s32.totalorder %s19, 0
    %p58 = por %p56, %p57
    %s60 = sadd.s32 %s59, 1
    %p63 = scmp.eq.s32.totalorder %s13, 1
    %p64 = scmp.ne.s32.totalorder %s59, %s61
    %p65 = scmp.eq.s32.totalorder %s13, 0
    %p66 = por %p64, %p65
    %p67 = scmp.ne.s32.totalorder %s59, %s61
    %p68 = scmp.eq.s32.totalorder %s18, 1
    %p69 = por %p67, %p68
    %p70 = scmp.ne.s32.totalorder %s61, %s62
    %p71 = scmp.eq.s32.totalorder %s18, 0
    %p72 = por %p70, %p71
    %p73 = scmp.ne.s32.totalorder %s61, %s62
    %p74 = scmp.eq.s32.totalorder %s19, 1
    %p75 = por %p73, %p74
    %p77 = scmp.ne.s32.totalorder %s62, %s76
    %p78 = scmp.eq.s32.totalorder %s19, 0
    %p79 = por %p77, %p78
    %s81 = sadd.s32 %s80, 1
    %p84 = scmp.eq.s32.totalorder %s13, 1
    %p85 = scmp.ne.s32.totalorder %s80, %s82
    %p86 = scmp.eq.s32.totalorder %s13, 0
    %p87 = por %p85, %p86
    %p88 = scmp.ne.s32.totalorder %s80, %s82
    %p89 = scmp.eq.s32.totalorder %s18, 1
    %p90 = por %p88, %p89
    %p91 = scmp.ne.s32.totalorder %s82, %s83
    %p92 = scmp.eq.s32.totalorder %s18, 0
    %p93 = por %p91, %p92
    %p94 = scmp.ne.s32.totalorder %s82, %s83
    %p95 = scmp.eq.s32.totalorder %s19, 1
    %p96 = por %p94, %p95
    %p98 = scmp.ne.s32.totalorder %s83, %s97
    %p99 = scmp.eq.s32.totalorder %s19, 0
    %p100 = por %p98, %p99
    %s102 = sadd.s32 %s101, 1
    %p105 = scmp.eq.s32.totalorder %s13, 1
    %p106 = scmp.ne.s32.totalorder %s101, %s103
    %p107 = scmp.eq.s32.totalorder %s13, 0
    %p108 = por %p106, %p107
    %p109 = scmp.ne.s32.totalorder %s101, %s103
    %p110 = scmp.eq.s32.totalorder %s18, 1
    %p111 = por %p109, %p110
    %p112 = scmp.ne.s32.totalorder %s103, %s104
    %p113 = scmp.eq.s32.totalorder %s18, 0
    %p114 = por %p112, %p113
    %p115 = scmp.ne.s32.totalorder %s103, %s104
    %p116 = scmp.eq.s32.totalorder %s19, 1
    %p117 = por %p115, %p116
    %p119 = scmp.ne.s32.totalorder %s104, %s118
    %p120 = scmp.eq.s32.totalorder %s19, 0
    %p121 = por %p119, %p120
    %s123 = sadd.s32 %s122, 1
    %p126 = scmp.eq.s32.totalorder %s13, 1
    %p127 = scmp.ne.s32.totalorder %s122, %s124
    %p128 = scmp.eq.s32.totalorder %s13, 0
    %p129 = por %p127, %p128
    %p130 = scmp.ne.s32.totalorder %s122, %s124
    %p131 = scmp.eq.s32.totalorder %s18, 1
    %p132 = por %p130, %p131
    %p133 = scmp.ne.s32.totalorder %s124, %s125
    %p134 = scmp.eq.s32.totalorder %s18, 0
    %p135 = por %p133, %p134
    %p136 = scmp.ne.s32.totalorder %s124, %s125
    %p137 = scmp.eq.s32.totalorder %s19, 1
    %p138 = por %p136, %p137
    %p140 = scmp.ne.s32.totalorder %s125, %s139
    %p141 = scmp.eq.s32.totalorder %s19, 0
    %p142 = por %p140, %p141
    %s144 = sadd.s32 %s143, 1
    %p147 = scmp.eq.s32.totalorder %s13, 1
    %p148 = scmp.ne.s32.totalorder %s143, %s145
    %p149 = scmp.eq.s32.totalorder %s13, 0
    %p150 = por %p148, %p149
    %p151 = scmp.ne.s32.totalorder %s143, %s145
    %p152 = scmp.eq.s32.totalorder %s18, 1
    %p153 = por %p151, %p152
    %p154 = scmp.ne.s32.totalorder %s145, %s146
    %p155 = scmp.eq.s32.totalorder %s18, 0
    %p156 = por %p154, %p155
    %p157 = scmp.ne.s32.totalorder %s145, %s146
    %p158 = scmp.eq.s32.totalorder %s19, 1
    %p159 = por %p157, %p158
    %p161 = scmp.ne.s32.totalorder %s146, %s160
    %p162 = scmp.eq.s32.totalorder %s19, 0
    %p163 = por %p161, %p162
    %s165 = sadd.s32 %s164, 1
    %p168 = scmp.eq.s32.totalorder %s13, 1
    %p169 = scmp.ne.s32.totalorder %s164, %s166
    %p170 = scmp.eq.s32.totalorder %s13, 0
    %p171 = por %p169, %p170
    %p172 = scmp.ne.s32.totalorder %s164, %s166
    %p173 = scmp.eq.s32.totalorder %s18, 1
    %p174 = por %p172, %p173
    %p175 = scmp.ne.s32.totalorder %s166, %s167
    %p176 = scmp.eq.s32.totalorder %s18, 0
    %p177 = por %p175, %p176
    %p178 = scmp.ne.s32.totalorder %s166, %s167
    %p179 = scmp.eq.s32.totalorder %s19, 1
    %p180 = por %p178, %p179
    %p182 = scmp.ne.s32.totalorder %s167, %s181
    %p183 = scmp.eq.s32.totalorder %s19, 0
    %p184 = por %p182, %p183
    %s185 = ssub.s32 %s20, %s32
    %s186 = ssub.s32 %s21, %s28
    %s187 = sor.u32 %s185, %s186
    %p188 = scmp.eq.s32.totalorder %s187, 0
    %s190 = sadd.s32 %s189, 1
    %s191 = scalar_select %p188, %s189, %s190
    %p194 = pneg %p188
    %p195 = scmp.eq.s32.totalorder %s13, 1
    %p196 = por %p194, %p195
    %p197 = scmp.ne.s32.totalorder %s189, %s192
    %p198 = scmp.eq.s32.totalorder %s13, 0
    %p199 = por %p197, %p198
    %p200 = scmp.ne.s32.totalorder %s189, %s192
    %p201 = scmp.eq.s32.totalorder %s18, 1
    %p202 = por %p200, %p201
    %p203 = scmp.ne.s32.totalorder %s192, %s193
    %p204 = scmp.eq.s32.totalorder %s18, 0
    %p205 = por %p203, %p204
    %p206 = scmp.ne.s32.totalorder %s192, %s193
    %p207 = scmp.eq.s32.totalorder %s19, 1
    %p208 = por %p206, %p207
    %p210 = scmp.ne.s32.totalorder %s193, %s209
    %p211 = scmp.eq.s32.totalorder %s19, 0
    %p212 = por %p210, %p211
    %p213 = scmp.le.s32.totalorder 1, %s13
    %p214 = scmp.lt.s32.totalorder %s13, 3
    %p215 = pnand %p213, %p214
    %p216 = pneg %p215
    // Predicated region
    $region9: #{inconv_fwd.2} parent=5 // pred_check
      _
    $region10: #{inconv_fwd.2} parent=5 // pred_check_branch
      %218 = sbr.rel (%p215) target = $region12
    $region11: #{inconv_fwd.2} parent=5 // pred_region
      %s219 = ssub.s32 %s13, 1
      // Predicated region
      $region13: #{inconv_fwd.2} parent=11 // pred_check
        %p220 = pneg %p72
      $region14: #{inconv_fwd.2} parent=11 // pred_check_branch
        %222 = sbr.rel (%p220) target = $region16
      $region15: #{inconv_fwd.2} parent=11 // pred_region
        _
      $region16: #{inconv_fwd.2} parent=11 // pred_fallthru
        _
      // Predicated region
      $region17: #{inconv_fwd.2} parent=11 // pred_check
        %p223 = pneg %p93
      $region18: #{inconv_fwd.2} parent=11 // pred_check_branch
        %225 = sbr.rel (%p223) target = $region20
      $region19: #{inconv_fwd.2} parent=11 // pred_region
        _
      $region20: #{inconv_fwd.2} parent=11 // pred_fallthru
        _
      // Predicated region
      $region21: #{inconv_fwd.2} parent=11 // pred_check
        %p226 = pneg %p114
      $region22: #{inconv_fwd.2} parent=11 // pred_check_branch
        %228 = sbr.rel (%p226) target = $region24
      $region23: #{inconv_fwd.2} parent=11 // pred_region
        _
      $region24: #{inconv_fwd.2} parent=11 // pred_fallthru
        _
      // Predicated region
      $region25: #{inconv_fwd.2} parent=11 // pred_check
        %p229 = pneg %p135
      $region26: #{inconv_fwd.2} parent=11 // pred_check_branch
        %231 = sbr.rel (%p229) target = $region28
      $region27: #{inconv_fwd.2} parent=11 // pred_region
        _
      $region28: #{inconv_fwd.2} parent=11 // pred_fallthru
        _
      // Predicated region
      $region29: #{inconv_fwd.2} parent=11 // pred_check
        %p232 = pneg %p156
      $region30: #{inconv_fwd.2} parent=11 // pred_check_branch
        %234 = sbr.rel (%p232) target = $region32
      $region31: #{inconv_fwd.2} parent=11 // pred_region
        _
      $region32: #{inconv_fwd.2} parent=11 // pred_fallthru
        _
      // Predicated region
      $region33: #{inconv_fwd.2} parent=11 // pred_check
        %p235 = pneg %p177
      $region34: #{inconv_fwd.2} parent=11 // pred_check_branch
        %237 = sbr.rel (%p235) target = $region36
      $region35: #{inconv_fwd.2} parent=11 // pred_region
        _
      $region36: #{inconv_fwd.2} parent=11 // pred_fallthru
        _
    $region12: #{inconv_fwd.2} parent=5 // pred_fallthru
      _
    %p238 = scmp.lt.s32.totalorder %s13, 2
    // Predicated region
    $region37: #{inconv_fwd.2} parent=5 // pred_check
      %p239 = pneg %p238
    $region38: #{inconv_fwd.2} parent=5 // pred_check_branch
      %241 = sbr.rel (%p239) target = $region40
    $region39: #{inconv_fwd.2} parent=5 // pred_region
      // Predicated region
      $region41: #{inconv_fwd.2} parent=39 // pred_check
        %p242 = pneg %p45
      $region42: #{inconv_fwd.2} parent=39 // pred_check_branch
        %244 = sbr.rel (%p242) target = $region44
      $region43: #{inconv_fwd.2} parent=39 // pred_region
        %p245 = scmp.lt.s32.totalorder %s20, 1
        %s246 = scalar_select %p245, %s20, 1
        %s247 = smul.addr %s246, 3
        %s248 = smul.addr %s247, 8
        %s249 = scalar_lea.vmem %s0, %s248
      $region44: #{inconv_fwd.2} parent=39 // pred_fallthru
        _
    $region40: #{inconv_fwd.2} parent=5 // pred_fallthru
      _
    %p250 = scmp.le.s32.totalorder 1, %s13
    %p251 = scmp.lt.s32.totalorder %s13, 3
    %p252 = pnand %p250, %p251
    %p253 = pneg %p252
    // Predicated region
    $region45: #{inconv_fwd.2} parent=5 // pred_check
      _
    $region46: #{inconv_fwd.2} parent=5 // pred_check_branch
      %255 = sbr.rel (%p252) target = $region48
    $region47: #{inconv_fwd.2} parent=5 // pred_region
      %s256 = ssub.s32 %s13, 1
      %p257 = scmp.lt.s32.totalorder %s22, 1
      %s258 = scalar_select %p257, %s22, 1
      %s259 = smul.addr %s258, 3
      %s260 = smul.addr %s259, 8
      %s261 = scalar_lea.vmem %s0, %s260
      %p262 = pneg %p51
      %p263 = pneg %p48
      %p264 = pneg %p72
      %p265 = pneg %p69
      %p266 = pneg %p93
      %p267 = pneg %p90
      %p268 = pneg %p114
      %p269 = pneg %p111
      %p270 = pneg %p135
      %p271 = pneg %p132
      %p272 = pneg %p156
      %p273 = pneg %p153
      %p274 = pneg %p177
      %p275 = pneg %p174
      %p276 = pneg %p205
      %p277 = pneg %p202
      %s278 = smul.u32 3, %s23
      %p279 = scmp.lt.s32.totalorder %s22, 1
      %s280 = scalar_select %p279, %s22, 1
      %p281 = scmp.lt.s32.totalorder %s278, 2
      %s282 = scalar_select %p281, %s278, 2
      %s283 = smul.addr %s280, 3
      %s284 = sadd.s32 %s282, %s283
      %s285 = smul.addr %s284, 8
      %s286 = scalar_lea.vmem %s7, %s285
      %p287 = scmp.lt.s32.totalorder %s22, 1
      %s288 = scalar_select %p287, %s22, 1
      %s289 = smul.addr %s288, 3
      %s290 = smul.addr %s289, 8
      %s291 = scalar_lea.vmem %s0, %s290
      %s292 = smul.u32 3, %s23
      %p293 = scmp.lt.s32.totalorder %s22, 1
      %s294 = scalar_select %p293, %s22, 1
      %p295 = scmp.lt.s32.totalorder %s292, 2
      %s296 = scalar_select %p295, %s292, 2
      %s297 = smul.addr %s294, 3
      %s298 = sadd.s32 %s296, %s297
      %s299 = smul.addr %s298, 8
      %s300 = scalar_lea.vmem %s7, %s299
      %s301 = smul.u32 3, %s23
      %302 = vst [vmem:[#allocation2] sm:$0xff] 0.0
      %303 = vst [vmem:[#allocation2 + $0x8] sm:$0xff] 0.0
      %304 = vst [vmem:[#allocation2 + $0x10] sm:$0xff] 0.0
      %vm305 = vcmask 293888
      %306 = vst.msk [vmem:[#allocation2 + $0x18] sm:$0xff] %vm305, 0.0
      %v307 = vld [vmem:[%s291] sm:$0xff]
      %v308 = vld [vmem:[%s291 + $0x8] sm:$0xff]
      %v309 = vld [vmem:[%s291 + $0x10] sm:$0xff]
      %v310 = vld [vmem:[%s4] sm:$0xff]
      %312 = vset.pattern.permute.xlu0 0
      %313 = vperm.xlu0 %312, %v310
      %v314 = vpop.permute.xlu0 %313
      %v316 = vmul.f32 %v307, %v314
      %v317 = vmul.f32 %v308, %v314
      %v318 = vmul.f32 %v309, %v314
      %v319 = vld [vmem:[%s5] sm:$0xff]
      %321 = vset.pattern.permute.xlu0 0
      %322 = vperm.xlu0 %321, %v319
      %v323 = vpop.permute.xlu0 %322
      %v325 = vadd.f32 %v316, %v323
      %v326 = vadd.f32 %v317, %v323
      %v327 = vadd.f32 %v318, %v323
      %v328 = vmax.f32 %v325, 0.0
      %v329 = vmax.f32 %v326, 0.0
      %v330 = vmax.f32 %v327, 0.0
      %v331 = vld [vmem:[%s6] sm:$0x7]
      %v333 = vlaneseq
      %v334 = vshrl.u32 %v333, 7
      %v335 = vsub.s32 0, %v334
      %v336 = vrot.slane %v331, %v335
      %v337 = vlaneseq
      %v338 = vshrl.u32 %v337, 7
      %v339 = vsub.s32 1, %v338
      %v340 = vrot.slane %v331, %v339
      %v341 = vlaneseq
      %v342 = vshrl.u32 %v341, 7
      %v343 = vsub.s32 2, %v342
      %v344 = vrot.slane %v331, %v343
      %v348 = vmul.f32 %v328, %v336
      %v349 = vmul.f32 %v329, %v340
      %v350 = vmul.f32 %v330, %v344
      %354 = vrot.lane.b32.xlu0 %v348, 42
      %v355 = vpop.permute.xlu0 %354
      %356 = vrot.lane.b32.xlu0 %v349, 42
      %v357 = vpop.permute.xlu0 %356
      %358 = vrot.lane.b32.xlu0 %v350, 42
      %v359 = vpop.permute.xlu0 %358
      %vm360 = vcmask 343040
      %v361 = vsel %vm360, %v355, %v357
      %v362 = vsel %vm360, %v357, %v359
      %vm366 = vcmask 1047888
      %367 = vst.msk [vmem:[#allocation2] sm:$0xff] %vm366, %v355
      %368 = vst [vmem:[#allocation2 + $0x8] sm:$0xff] %v361
      %vm369 = vcmask 867328
      %370 = vst.msk [vmem:[#allocation2 + $0x10] sm:$0xff] %vm369, %v362
      %v371 = vld [vmem:[#allocation2] sm:$0xff]
      %v372 = vld [vmem:[#allocation2 + $0x8] sm:$0xff]
      %v373 = vld [vmem:[#allocation2 + $0x10] sm:$0xff]
      %374 = vst [vmem:[#allocation3] sm:$0xff] %v371
      %375 = vst [vmem:[#allocation3 + $0x8] sm:$0xff] %v372
      %vm376 = vcmask 523264
      %377 = vst.msk [vmem:[#allocation3 + $0x10] sm:$0xff] %vm376, %v373
      %v378 = vld [vmem:[#allocation2] sm:$0xff]
      %v379 = vld [vmem:[#allocation2 + $0x8] sm:$0xff]
      %v380 = vld [vmem:[#allocation2 + $0x10] sm:$0xff]
      %384 = vrot.lane.b32.xlu0 %v378, 127
      %v385 = vpop.permute.xlu0 %384
      %386 = vrot.lane.b32.xlu0 %v379, 127
      %v387 = vpop.permute.xlu0 %386
      %388 = vrot.lane.b32.xlu0 %v380, 127
      %v389 = vpop.permute.xlu0 %388
      %vm390 = vcmask 1039360
      %v391 = vsel %vm390, %v385, %v387
      %v392 = vsel %vm390, %v387, %v389
      %396 = vst [vmem:[#allocation3 + $0x18] sm:$0xff] %v391
      %397 = vst [vmem:[#allocation3 + $0x20] sm:$0xff] %v392
      %398 = vst.msk [vmem:[#allocation3 + $0x28] sm:$0xff] %vm376, %v389
      %v399 = vld [vmem:[#allocation2] sm:$0xff]
      %v400 = vld [vmem:[#allocation2 + $0x8] sm:$0xff]
      %v401 = vld [vmem:[#allocation2 + $0x10] sm:$0xff]
      %405 = vrot.lane.b32.xlu0 %v399, 126
      %v406 = vpop.permute.xlu0 %405
      %407 = vrot.lane.b32.xlu0 %v400, 126
      %v408 = vpop.permute.xlu0 %407
      %409 = vrot.lane.b32.xlu0 %v401, 126
      %v410 = vpop.permute.xlu0 %409
      %vm411 = vcmask 1031168
      %v412 = vsel %vm411, %v406, %v408
      %v413 = vsel %vm411, %v408, %v410
      %417 = vst [vmem:[#allocation3 + $0x30] sm:$0xff] %v412
      %418 = vst [vmem:[#allocation3 + $0x38] sm:$0xff] %v413
      %419 = vst.msk [vmem:[#allocation3 + $0x40] sm:$0xff] %vm376, %v410
      %v420 = vld [vmem:[#allocation2] sm:$0xff]
      %v421 = vld [vmem:[#allocation2 + $0x8] sm:$0xff]
      %v422 = vld [vmem:[#allocation2 + $0x10] sm:$0xff]
      %426 = vrot.lane.b32.xlu0 %v420, 125
      %v427 = vpop.permute.xlu0 %426
      %428 = vrot.lane.b32.xlu0 %v421, 125
      %v429 = vpop.permute.xlu0 %428
      %430 = vrot.lane.b32.xlu0 %v422, 125
      %v431 = vpop.permute.xlu0 %430
      %vm432 = vcmask 1022976
      %v433 = vsel %vm432, %v427, %v429
      %v434 = vsel %vm432, %v429, %v431
      %438 = vst [vmem:[#allocation3 + $0x48] sm:$0xff] %v433
      %439 = vst [vmem:[#allocation3 + $0x50] sm:$0xff] %v434
      %440 = vst.msk [vmem:[#allocation3 + $0x58] sm:$0xff] %vm376, %v431
      %v441 = vld [vmem:[#allocation2] sm:$0xff]
      %v442 = vld [vmem:[#allocation2 + $0x8] sm:$0xff]
      %v443 = vld [vmem:[#allocation2 + $0x10] sm:$0xff]
      %447 = vrot.lane.b32.xlu0 %v441, 124
      %v448 = vpop.permute.xlu0 %447
      %449 = vrot.lane.b32.xlu0 %v442, 124
      %v450 = vpop.permute.xlu0 %449
      %451 = vrot.lane.b32.xlu0 %v443, 124
      %v452 = vpop.permute.xlu0 %451
      %vm453 = vcmask 1014784
      %v454 = vsel %vm453, %v448, %v450
      %v455 = vsel %vm453, %v450, %v452
      %459 = vst [vmem:[#allocation3 + $0x60] sm:$0xff] %v454
      %460 = vst [vmem:[#allocation3 + $0x68] sm:$0xff] %v455
      %461 = vst.msk [vmem:[#allocation3 + $0x70] sm:$0xff] %vm376, %v452
      %v462 = vld [vmem:[#allocation2] sm:$0xff]
      %v463 = vld [vmem:[#allocation2 + $0x8] sm:$0xff]
      %v464 = vld [vmem:[#allocation2 + $0x10] sm:$0xff]
      %468 = vrot.lane.b32.xlu0 %v462, 108
      %v469 = vpop.permute.xlu0 %468
      %470 = vrot.lane.b32.xlu0 %v463, 108
      %v471 = vpop.permute.xlu0 %470
      %472 = vrot.lane.b32.xlu0 %v464, 108
      %v473 = vpop.permute.xlu0 %472
      %vm474 = vcmask 883712
      %v475 = vsel %vm474, %v469, %v471
      %v476 = vsel %vm474, %v471, %v473
      %480 = vst [vmem:[#allocation3 + $0x78] sm:$0xff] %v475
      %481 = vst [vmem:[#allocation3 + $0x80] sm:$0xff] %v476
      %482 = vst.msk [vmem:[#allocation3 + $0x88] sm:$0xff] %vm376, %v473
      %v483 = vld [vmem:[#allocation2] sm:$0xff]
      %v484 = vld [vmem:[#allocation2 + $0x8] sm:$0xff]
      %v485 = vld [vmem:[#allocation2 + $0x10] sm:$0xff]
      %489 = vrot.lane.b32.xlu0 %v483, 107
      %v490 = vpop.permute.xlu0 %489
      %491 = vrot.lane.b32.xlu0 %v484, 107
      %v492 = vpop.permute.xlu0 %491
      %493 = vrot.lane.b32.xlu0 %v485, 107
      %v494 = vpop.permute.xlu0 %493
      %vm495 = vcmask 875520
      %v496 = vsel %vm495, %v490, %v492
      %v497 = vsel %vm495, %v492, %v494
      %501 = vst [vmem:[#allocation3 + $0x90] sm:$0xff] %v496
      %502 = vst [vmem:[#allocation3 + $0x98] sm:$0xff] %v497
      %503 = vst.msk [vmem:[#allocation3 + $0xa0] sm:$0xff] %vm376, %v494
      %v504 = vld [vmem:[#allocation2] sm:$0xff]
      %v505 = vld [vmem:[#allocation2 + $0x8] sm:$0xff]
      %v506 = vld [vmem:[#allocation2 + $0x10] sm:$0xff]
      %510 = vrot.lane.b32.xlu0 %v504, 106
      %v511 = vpop.permute.xlu0 %510
      %512 = vrot.lane.b32.xlu0 %v505, 106
      %v513 = vpop.permute.xlu0 %512
      %514 = vrot.lane.b32.xlu0 %v506, 106
      %v515 = vpop.permute.xlu0 %514
      %v516 = vsel %vm369, %v511, %v513
      %v517 = vsel %vm369, %v513, %v515
      %521 = vst [vmem:[#allocation3 + $0xa8] sm:$0xff] %v516
      %522 = vst [vmem:[#allocation3 + $0xb0] sm:$0xff] %v517
      %523 = vst.msk [vmem:[#allocation3 + $0xb8] sm:$0xff] %vm376, %v515
      %v524 = vld [vmem:[#allocation2] sm:$0xff]
      %v525 = vld [vmem:[#allocation2 + $0x8] sm:$0xff]
      %v526 = vld [vmem:[#allocation2 + $0x10] sm:$0xff]
      %530 = vrot.lane.b32.xlu0 %v524, 105
      %v531 = vpop.permute.xlu0 %530
      %532 = vrot.lane.b32.xlu0 %v525, 105
      %v533 = vpop.permute.xlu0 %532
      %534 = vrot.lane.b32.xlu0 %v526, 105
      %v535 = vpop.permute.xlu0 %534
      %vm536 = vcmask 859136
      %v537 = vsel %vm536, %v531, %v533
      %v538 = vsel %vm536, %v533, %v535
      %542 = vst [vmem:[#allocation3 + $0xc0] sm:$0xff] %v537
      %543 = vst [vmem:[#allocation3 + $0xc8] sm:$0xff] %v538
      %544 = vst.msk [vmem:[#allocation3 + $0xd0] sm:$0xff] %vm376, %v535
      %v545 = vld [vmem:[#allocation2] sm:$0xff]
      %v546 = vld [vmem:[#allocation2 + $0x8] sm:$0xff]
      %v547 = vld [vmem:[#allocation2 + $0x10] sm:$0xff]
      %551 = vrot.lane.b32.xlu0 %v545, 104
      %v552 = vpop.permute.xlu0 %551
      %553 = vrot.lane.b32.xlu0 %v546, 104
      %v554 = vpop.permute.xlu0 %553
      %555 = vrot.lane.b32.xlu0 %v547, 104
      %v556 = vpop.permute.xlu0 %555
      %vm557 = vcmask 850944
      %v558 = vsel %vm557, %v552, %v554
      %v559 = vsel %vm557, %v554, %v556
      %563 = vst [vmem:[#allocation3 + $0xd8] sm:$0xff] %v558
      %564 = vst [vmem:[#allocation3 + $0xe0] sm:$0xff] %v559
      %565 = vst.msk [vmem:[#allocation3 + $0xe8] sm:$0xff] %vm376, %v556
      %v566 = vld [vmem:[#allocation2] sm:$0xff]
      %v567 = vld [vmem:[#allocation2 + $0x8] sm:$0xff]
      %v568 = vld [vmem:[#allocation2 + $0x10] sm:$0xff]
      %572 = vrot.lane.b32.xlu0 %v566, 88
      %v573 = vpop.permute.xlu0 %572
      %574 = vrot.lane.b32.xlu0 %v567, 88
      %v575 = vpop.permute.xlu0 %574
      %576 = vrot.lane.b32.xlu0 %v568, 88
      %v577 = vpop.permute.xlu0 %576
      %vm578 = vcmask 719872
      %v579 = vsel %vm578, %v573, %v575
      %v580 = vsel %vm578, %v575, %v577
      %584 = vst [vmem:[#allocation3 + $0xf0] sm:$0xff] %v579
      %585 = vst [vmem:[#allocation3 + $0xf8] sm:$0xff] %v580
      %586 = vst.msk [vmem:[#allocation3 + $0x100] sm:$0xff] %vm376, %v577
      %v587 = vld [vmem:[#allocation2] sm:$0xff]
      %v588 = vld [vmem:[#allocation2 + $0x8] sm:$0xff]
      %v589 = vld [vmem:[#allocation2 + $0x10] sm:$0xff]
      %593 = vrot.lane.b32.xlu0 %v587, 87
      %v594 = vpop.permute.xlu0 %593
      %595 = vrot.lane.b32.xlu0 %v588, 87
      %v596 = vpop.permute.xlu0 %595
      %597 = vrot.lane.b32.xlu0 %v589, 87
      %v598 = vpop.permute.xlu0 %597
      %vm599 = vcmask 711680
      %v600 = vsel %vm599, %v594, %v596
      %v601 = vsel %vm599, %v596, %v598
      %605 = vst [vmem:[#allocation3 + $0x108] sm:$0xff] %v600
      %606 = vst [vmem:[#allocation3 + $0x110] sm:$0xff] %v601
      %607 = vst.msk [vmem:[#allocation3 + $0x118] sm:$0xff] %vm376, %v598
      %v608 = vld [vmem:[#allocation2] sm:$0xff]
      %v609 = vld [vmem:[#allocation2 + $0x8] sm:$0xff]
      %v610 = vld [vmem:[#allocation2 + $0x10] sm:$0xff]
      %614 = vrot.lane.b32.xlu0 %v608, 86
      %v615 = vpop.permute.xlu0 %614
      %616 = vrot.lane.b32.xlu0 %v609, 86
      %v617 = vpop.permute.xlu0 %616
      %618 = vrot.lane.b32.xlu0 %v610, 86
      %v619 = vpop.permute.xlu0 %618
      %vm620 = vcmask 703488
      %v621 = vsel %vm620, %v615, %v617
      %v622 = vsel %vm620, %v617, %v619
      %626 = vst [vmem:[#allocation3 + $0x120] sm:$0xff] %v621
      %627 = vst [vmem:[#allocation3 + $0x128] sm:$0xff] %v622
      %628 = vst.msk [vmem:[#allocation3 + $0x130] sm:$0xff] %vm376, %v619
      %v629 = vld [vmem:[#allocation2] sm:$0xff]
      %v630 = vld [vmem:[#allocation2 + $0x8] sm:$0xff]
      %v631 = vld [vmem:[#allocation2 + $0x10] sm:$0xff]
      %635 = vrot.lane.b32.xlu0 %v629, 85
      %v636 = vpop.permute.xlu0 %635
      %637 = vrot.lane.b32.xlu0 %v630, 85
      %v638 = vpop.permute.xlu0 %637
      %639 = vrot.lane.b32.xlu0 %v631, 85
      %v640 = vpop.permute.xlu0 %639
      %vm641 = vcmask 695296
      %v642 = vsel %vm641, %v636, %v638
      %v643 = vsel %vm641, %v638, %v640
      %647 = vst [vmem:[#allocation3 + $0x138] sm:$0xff] %v642
      %648 = vst [vmem:[#allocation3 + $0x140] sm:$0xff] %v643
      %649 = vst.msk [vmem:[#allocation3 + $0x148] sm:$0xff] %vm376, %v640
      %v650 = vld [vmem:[#allocation2] sm:$0xff]
      %v651 = vld [vmem:[#allocation2 + $0x8] sm:$0xff]
      %v652 = vld [vmem:[#allocation2 + $0x10] sm:$0xff]
      %656 = vrot.lane.b32.xlu0 %v650, 84
      %v657 = vpop.permute.xlu0 %656
      %658 = vrot.lane.b32.xlu0 %v651, 84
      %v659 = vpop.permute.xlu0 %658
      %660 = vrot.lane.b32.xlu0 %v652, 84
      %v661 = vpop.permute.xlu0 %660
      %vm662 = vcmask 687104
      %v663 = vsel %vm662, %v657, %v659
      %v664 = vsel %vm662, %v659, %v661
      %668 = vst [vmem:[#allocation3 + $0x150] sm:$0xff] %v663
      %669 = vst [vmem:[#allocation3 + $0x158] sm:$0xff] %v664
      %670 = vst.msk [vmem:[#allocation3 + $0x160] sm:$0xff] %vm376, %v661
      %v671 = vld [vmem:[#allocation2] sm:$0xff]
      %v672 = vld [vmem:[#allocation2 + $0x8] sm:$0xff]
      %v673 = vld [vmem:[#allocation2 + $0x10] sm:$0xff]
      %677 = vrot.lane.b32.xlu0 %v671, 68
      %v678 = vpop.permute.xlu0 %677
      %679 = vrot.lane.b32.xlu0 %v672, 68
      %v680 = vpop.permute.xlu0 %679
      %681 = vrot.lane.b32.xlu0 %v673, 68
      %v682 = vpop.permute.xlu0 %681
      %vm683 = vcmask 556032
      %v684 = vsel %vm683, %v678, %v680
      %v685 = vsel %vm683, %v680, %v682
      %689 = vst [vmem:[#allocation3 + $0x168] sm:$0xff] %v684
      %690 = vst [vmem:[#allocation3 + $0x170] sm:$0xff] %v685
      %691 = vst.msk [vmem:[#allocation3 + $0x178] sm:$0xff] %vm376, %v682
      %v692 = vld [vmem:[#allocation2] sm:$0xff]
      %v693 = vld [vmem:[#allocation2 + $0x8] sm:$0xff]
      %v694 = vld [vmem:[#allocation2 + $0x10] sm:$0xff]
      %698 = vrot.lane.b32.xlu0 %v692, 67
      %v699 = vpop.permute.xlu0 %698
      %700 = vrot.lane.b32.xlu0 %v693, 67
      %v701 = vpop.permute.xlu0 %700
      %702 = vrot.lane.b32.xlu0 %v694, 67
      %v703 = vpop.permute.xlu0 %702
      %vm704 = vcmask 547840
      %v705 = vsel %vm704, %v699, %v701
      %v706 = vsel %vm704, %v701, %v703
      %710 = vst [vmem:[#allocation3 + $0x180] sm:$0xff] %v705
      %711 = vst [vmem:[#allocation3 + $0x188] sm:$0xff] %v706
      %712 = vst.msk [vmem:[#allocation3 + $0x190] sm:$0xff] %vm376, %v703
      %v713 = vld [vmem:[#allocation2] sm:$0xff]
      %v714 = vld [vmem:[#allocation2 + $0x8] sm:$0xff]
      %v715 = vld [vmem:[#allocation2 + $0x10] sm:$0xff]
      %719 = vrot.lane.b32.xlu0 %v713, 66
      %v720 = vpop.permute.xlu0 %719
      %721 = vrot.lane.b32.xlu0 %v714, 66
      %v722 = vpop.permute.xlu0 %721
      %723 = vrot.lane.b32.xlu0 %v715, 66
      %v724 = vpop.permute.xlu0 %723
      %vm725 = vcmask 539648
      %v726 = vsel %vm725, %v720, %v722
      %v727 = vsel %vm725, %v722, %v724
      %731 = vst [vmem:[#allocation3 + $0x198] sm:$0xff] %v726
      %732 = vst [vmem:[#allocation3 + $0x1a0] sm:$0xff] %v727
      %733 = vst.msk [vmem:[#allocation3 + $0x1a8] sm:$0xff] %vm376, %v724
      %v734 = vld [vmem:[#allocation2] sm:$0xff]
      %v735 = vld [vmem:[#allocation2 + $0x8] sm:$0xff]
      %v736 = vld [vmem:[#allocation2 + $0x10] sm:$0xff]
      %740 = vrot.lane.b32.xlu0 %v734, 65
      %v741 = vpop.permute.xlu0 %740
      %742 = vrot.lane.b32.xlu0 %v735, 65
      %v743 = vpop.permute.xlu0 %742
      %744 = vrot.lane.b32.xlu0 %v736, 65
      %v745 = vpop.permute.xlu0 %744
      %vm746 = vcmask 531456
      %v747 = vsel %vm746, %v741, %v743
      %v748 = vsel %vm746, %v743, %v745
      %752 = vst [vmem:[#allocation3 + $0x1b0] sm:$0xff] %v747
      %753 = vst [vmem:[#allocation3 + $0x1b8] sm:$0xff] %v748
      %754 = vst.msk [vmem:[#allocation3 + $0x1c0] sm:$0xff] %vm376, %v745
      %v755 = vld [vmem:[#allocation2] sm:$0xff]
      %v756 = vld [vmem:[#allocation2 + $0x8] sm:$0xff]
      %v757 = vld [vmem:[#allocation2 + $0x10] sm:$0xff]
      %761 = vrot.lane.b32.xlu0 %v755, 64
      %v762 = vpop.permute.xlu0 %761
      %763 = vrot.lane.b32.xlu0 %v756, 64
      %v764 = vpop.permute.xlu0 %763
      %765 = vrot.lane.b32.xlu0 %v757, 64
      %v766 = vpop.permute.xlu0 %765
      %v767 = vsel %vm376, %v762, %v764
      %v768 = vsel %vm376, %v764, %v766
      %772 = vst [vmem:[#allocation3 + $0x1c8] sm:$0xff] %v767
      %773 = vst [vmem:[#allocation3 + $0x1d0] sm:$0xff] %v768
      %774 = vst.msk [vmem:[#allocation3 + $0x1d8] sm:$0xff] %vm376, %v766
      %v775 = vld [vmem:[#allocation2] sm:$0xff]
      %v776 = vld [vmem:[#allocation2 + $0x8] sm:$0xff]
      %v777 = vld [vmem:[#allocation2 + $0x10] sm:$0xff]
      %v778 = vld [vmem:[#allocation2 + $0x18] sm:$0xff]
      %783 = vrot.lane.b32.xlu0 %v775, 48
      %v784 = vpop.permute.xlu0 %783
      %785 = vrot.lane.b32.xlu0 %v776, 48
      %v786 = vpop.permute.xlu0 %785
      %787 = vrot.lane.b32.xlu0 %v777, 48
      %v788 = vpop.permute.xlu0 %787
      %789 = vrot.lane.b32.xlu0 %v778, 48
      %v790 = vpop.permute.xlu0 %789
      %vm791 = vcmask 392192
      %v792 = vsel %vm791, %v784, %v786
      %v793 = vsel %vm791, %v786, %v788
      %v794 = vsel %vm791, %v788, %v790
      %798 = vst [vmem:[#allocation3 + $0x1e0] sm:$0xff] %v792
      %799 = vst [vmem:[#allocation3 + $0x1e8] sm:$0xff] %v793
      %800 = vst.msk [vmem:[#allocation3 + $0x1f0] sm:$0xff] %vm376, %v794
      %v801 = vld [vmem:[#allocation2] sm:$0xff]
      %v802 = vld [vmem:[#allocation2 + $0x8] sm:$0xff]
      %v803 = vld [vmem:[#allocation2 + $0x10] sm:$0xff]
      %v804 = vld [vmem:[#allocation2 + $0x18] sm:$0xff]
      %809 = vrot.lane.b32.xlu0 %v801, 47
      %v810 = vpop.permute.xlu0 %809
      %811 = vrot.lane.b32.xlu0 %v802, 47
      %v812 = vpop.permute.xlu0 %811
      %813 = vrot.lane.b32.xlu0 %v803, 47
      %v814 = vpop.permute.xlu0 %813
      %815 = vrot.lane.b32.xlu0 %v804, 47
      %v816 = vpop.permute.xlu0 %815
      %vm817 = vcmask 384000
      %v818 = vsel %vm817, %v810, %v812
      %v819 = vsel %vm817, %v812, %v814
      %v820 = vsel %vm817, %v814, %v816
      %824 = vst [vmem:[#allocation3 + $0x1f8] sm:$0xff] %v818
      %825 = vst [vmem:[#allocation3 + $0x200] sm:$0xff] %v819
      %826 = vst.msk [vmem:[#allocation3 + $0x208] sm:$0xff] %vm376, %v820
      %v827 = vld [vmem:[#allocation2] sm:$0xff]
      %v828 = vld [vmem:[#allocation2 + $0x8] sm:$0xff]
      %v829 = vld [vmem:[#allocation2 + $0x10] sm:$0xff]
      %v830 = vld [vmem:[#allocation2 + $0x18] sm:$0xff]
      %835 = vrot.lane.b32.xlu0 %v827, 46
      %v836 = vpop.permute.xlu0 %835
      %837 = vrot.lane.b32.xlu0 %v828, 46
      %v838 = vpop.permute.xlu0 %837
      %839 = vrot.lane.b32.xlu0 %v829, 46
      %v840 = vpop.permute.xlu0 %839
      %841 = vrot.lane.b32.xlu0 %v830, 46
      %v842 = vpop.permute.xlu0 %841
      %vm843 = vcmask 375808
      %v844 = vsel %vm843, %v836, %v838
      %v845 = vsel %vm843, %v838, %v840
      %v846 = vsel %vm843, %v840, %v842
      %850 = vst [vmem:[#allocation3 + $0x210] sm:$0xff] %v844
      %851 = vst [vmem:[#allocation3 + $0x218] sm:$0xff] %v845
      %852 = vst.msk [vmem:[#allocation3 + $0x220] sm:$0xff] %vm376, %v846
      %v853 = vld [vmem:[#allocation2] sm:$0xff]
      %v854 = vld [vmem:[#allocation2 + $0x8] sm:$0xff]
      %v855 = vld [vmem:[#allocation2 + $0x10] sm:$0xff]
      %v856 = vld [vmem:[#allocation2 + $0x18] sm:$0xff]
      %861 = vrot.lane.b32.xlu0 %v853, 45
      %v862 = vpop.permute.xlu0 %861
      %863 = vrot.lane.b32.xlu0 %v854, 45
      %v864 = vpop.permute.xlu0 %863
      %865 = vrot.lane.b32.xlu0 %v855, 45
      %v866 = vpop.permute.xlu0 %865
      %867 = vrot.lane.b32.xlu0 %v856, 45
      %v868 = vpop.permute.xlu0 %867
      %vm869 = vcmask 367616
      %v870 = vsel %vm869, %v862, %v864
      %v871 = vsel %vm869, %v864, %v866
      %v872 = vsel %vm869, %v866, %v868
      %876 = vst [vmem:[#allocation3 + $0x228] sm:$0xff] %v870
      %877 = vst [vmem:[#allocation3 + $0x230] sm:$0xff] %v871
      %878 = vst.msk [vmem:[#allocation3 + $0x238] sm:$0xff] %vm376, %v872
      %v879 = vld [vmem:[#allocation2] sm:$0xff]
      %v880 = vld [vmem:[#allocation2 + $0x8] sm:$0xff]
      %v881 = vld [vmem:[#allocation2 + $0x10] sm:$0xff]
      %v882 = vld [vmem:[#allocation2 + $0x18] sm:$0xff]
      %887 = vrot.lane.b32.xlu0 %v879, 44
      %v888 = vpop.permute.xlu0 %887
      %889 = vrot.lane.b32.xlu0 %v880, 44
      %v890 = vpop.permute.xlu0 %889
      %891 = vrot.lane.b32.xlu0 %v881, 44
      %v892 = vpop.permute.xlu0 %891
      %893 = vrot.lane.b32.xlu0 %v882, 44
      %v894 = vpop.permute.xlu0 %893
      %vm895 = vcmask 359424
      %v896 = vsel %vm895, %v888, %v890
      %v897 = vsel %vm895, %v890, %v892
      %v898 = vsel %vm895, %v892, %v894
      %902 = vst [vmem:[#allocation3 + $0x240] sm:$0xff] %v896
      %903 = vst [vmem:[#allocation3 + $0x248] sm:$0xff] %v897
      %904 = vst.msk [vmem:[#allocation3 + $0x250] sm:$0xff] %vm376, %v898
      %v905 = vld [vmem:[%s1] sm:$0xff]
      %v906 = vld [vmem:[%s1 + $0x8] sm:$0xff]
      %v907 = vld [vmem:[#allocation3] sm:$0xff]
      %v908 = vld [vmem:[#allocation3 + $0x8] sm:$0xff]
      %v909 = vld [vmem:[#allocation3 + $0x10] sm:$0xff]
      %v910 = vld [vmem:[#allocation3 + $0x18] sm:$0xff]
      %v911 = vld [vmem:[#allocation3 + $0x20] sm:$0xff]
      %v912 = vld [vmem:[#allocation3 + $0x28] sm:$0xff]
      %v913 = vld [vmem:[#allocation3 + $0x30] sm:$0xff]
      %v914 = vld [vmem:[#allocation3 + $0x38] sm:$0xff]
      %v915 = vld [vmem:[#allocation3 + $0x40] sm:$0xff]
      %v916 = vld [vmem:[#allocation3 + $0x48] sm:$0xff]
      %v917 = vld [vmem:[#allocation3 + $0x50] sm:$0xff]
      %v918 = vld [vmem:[#allocation3 + $0x58] sm:$0xff]
      %v919 = vld [vmem:[#allocation3 + $0x60] sm:$0xff]
      %v920 = vld [vmem:[#allocation3 + $0x68] sm:$0xff]
      %v921 = vld [vmem:[#allocation3 + $0x70] sm:$0xff]
      %v922 = vld [vmem:[#allocation3 + $0x78] sm:$0xff]
      %v923 = vld [vmem:[#allocation3 + $0x80] sm:$0xff]
      %v924 = vld [vmem:[#allocation3 + $0x88] sm:$0xff]
      %v925 = vld [vmem:[#allocation3 + $0x90] sm:$0xff]
      %v926 = vld [vmem:[#allocation3 + $0x98] sm:$0xff]
      %v927 = vld [vmem:[#allocation3 + $0xa0] sm:$0xff]
      %v928 = vld [vmem:[#allocation3 + $0xa8] sm:$0xff]
      %v929 = vld [vmem:[#allocation3 + $0xb0] sm:$0xff]
      %v930 = vld [vmem:[#allocation3 + $0xb8] sm:$0xff]
      %v931 = vld [vmem:[#allocation3 + $0xc0] sm:$0xff]
      %v932 = vld [vmem:[#allocation3 + $0xc8] sm:$0xff]
      %v933 = vld [vmem:[#allocation3 + $0xd0] sm:$0xff]
      %v934 = vld [vmem:[#allocation3 + $0xd8] sm:$0xff]
      %v935 = vld [vmem:[#allocation3 + $0xe0] sm:$0xff]
      %v936 = vld [vmem:[#allocation3 + $0xe8] sm:$0xff]
      %v937 = vld [vmem:[#allocation3 + $0xf0] sm:$0xff]
      %v938 = vld [vmem:[#allocation3 + $0xf8] sm:$0xff]
      %v939 = vld [vmem:[#allocation3 + $0x100] sm:$0xff]
      %v940 = vld [vmem:[#allocation3 + $0x108] sm:$0xff]
      %v941 = vld [vmem:[#allocation3 + $0x110] sm:$0xff]
      %v942 = vld [vmem:[#allocation3 + $0x118] sm:$0xff]
      %v943 = vld [vmem:[#allocation3 + $0x120] sm:$0xff]
      %v944 = vld [vmem:[#allocation3 + $0x128] sm:$0xff]
      %v945 = vld [vmem:[#allocation3 + $0x130] sm:$0xff]
      %v946 = vld [vmem:[#allocation3 + $0x138] sm:$0xff]
      %v947 = vld [vmem:[#allocation3 + $0x140] sm:$0xff]
      %v948 = vld [vmem:[#allocation3 + $0x148] sm:$0xff]
      %v949 = vld [vmem:[#allocation3 + $0x150] sm:$0xff]
      %v950 = vld [vmem:[#allocation3 + $0x158] sm:$0xff]
      %v951 = vld [vmem:[#allocation3 + $0x160] sm:$0xff]
      %v952 = vld [vmem:[#allocation3 + $0x168] sm:$0xff]
      %v953 = vld [vmem:[#allocation3 + $0x170] sm:$0xff]
      %v954 = vld [vmem:[#allocation3 + $0x178] sm:$0xff]
      %v955 = vld [vmem:[#allocation3 + $0x180] sm:$0xff]
      %v956 = vld [vmem:[#allocation3 + $0x188] sm:$0xff]
      %v957 = vld [vmem:[#allocation3 + $0x190] sm:$0xff]
      %v958 = vld [vmem:[#allocation3 + $0x198] sm:$0xff]
      %v959 = vld [vmem:[#allocation3 + $0x1a0] sm:$0xff]
      %v960 = vld [vmem:[#allocation3 + $0x1a8] sm:$0xff]
      %v961 = vld [vmem:[#allocation3 + $0x1b0] sm:$0xff]
      %v962 = vld [vmem:[#allocation3 + $0x1b8] sm:$0xff]
      %v963 = vld [vmem:[#allocation3 + $0x1c0] sm:$0xff]
      %v964 = vld [vmem:[#allocation3 + $0x1c8] sm:$0xff]
      %v965 = vld [vmem:[#allocation3 + $0x1d0] sm:$0xff]
      %v966 = vld [vmem:[#allocation3 + $0x1d8] sm:$0xff]
      %v967 = vld [vmem:[#allocation3 + $0x1e0] sm:$0xff]
      %v968 = vld [vmem:[#allocation3 + $0x1e8] sm:$0xff]
      %v969 = vld [vmem:[#allocation3 + $0x1f0] sm:$0xff]
      %v970 = vld [vmem:[#allocation3 + $0x1f8] sm:$0xff]
      %v971 = vld [vmem:[#allocation3 + $0x200] sm:$0xff]
      %v972 = vld [vmem:[#allocation3 + $0x208] sm:$0xff]
      %v973 = vld [vmem:[#allocation3 + $0x210] sm:$0xff]
      %v974 = vld [vmem:[#allocation3 + $0x218] sm:$0xff]
      %v975 = vld [vmem:[#allocation3 + $0x220] sm:$0xff]
      %v976 = vld [vmem:[#allocation3 + $0x228] sm:$0xff]
      %v977 = vld [vmem:[#allocation3 + $0x230] sm:$0xff]
      %v978 = vld [vmem:[#allocation3 + $0x238] sm:$0xff]
      %v979 = vld [vmem:[#allocation3 + $0x240] sm:$0xff]
      %v980 = vld [vmem:[#allocation3 + $0x248] sm:$0xff]
      %v981 = vld [vmem:[#allocation3 + $0x250] sm:$0xff]
      %vm982 = vcmask 588800
      %v984 = vsel %vm982, %v906, 0
      %986 = vmatprep.subr.mxu0 %v908
      %987 = vmatpush1.msra.mxu0 %v907
      %988 = vmatprep.subr.mxu0 %v911
      %989 = vmatpush1.msra.mxu0 %v910
      %990 = vmatprep.subr.mxu0 %v914
      %991 = vmatpush1.msra.mxu0 %v913
      %992 = vmatprep.subr.mxu0 %v917
      %993 = vmatpush1.msra.mxu0 %v916
      %994 = vmatprep.subr.mxu0 %v920
      %995 = vmatpush1.msra.mxu0 %v919
      %996 = vmatprep.subr.mxu0 %v923
      %997 = vmatpush1.msra.mxu0 %v922
      %998 = vmatprep.subr.mxu0 %v926
      %999 = vmatpush1.msra.mxu0 %v925
      %1000 = vmatprep.subr.mxu0 %v929
      %1001 = vmatpush1.msra.mxu0 %v928
      %1002 = vmatprep.subr.mxu0 %v932
      %1003 = vmatpush1.msra.mxu0 %v931
      %1004 = vmatprep.subr.mxu0 %v935
      %1005 = vmatpush1.msra.mxu0 %v934
      %1006 = vmatprep.subr.mxu0 %v938
      %1007 = vmatpush1.msra.mxu0 %v937
      %1008 = vmatprep.subr.mxu0 %v941
      %1009 = vmatpush1.msra.mxu0 %v940
      %1010 = vmatprep.subr.mxu0 %v944
      %1011 = vmatpush1.msra.mxu0 %v943
      %1012 = vmatprep.subr.mxu0 %v947
      %1013 = vmatpush1.msra.mxu0 %v946
      %1014 = vmatprep.subr.mxu0 %v950
      %1015 = vmatpush1.msra.mxu0 %v949
      %1016 = vmatprep.subr.mxu0 %v953
      %1017 = vmatpush1.msra.mxu0 %v952
      %1018 = vmatprep.subr.mxu0 %v956
      %1019 = vmatpush1.msra.mxu0 %v955
      %1020 = vmatprep.subr.mxu0 %v959
      %1021 = vmatpush1.msra.mxu0 %v958
      %1022 = vmatprep.subr.mxu0 %v962
      %1023 = vmatpush1.msra.mxu0 %v961
      %1024 = vmatprep.subr.mxu0 %v965
      %1025 = vmatpush1.msra.mxu0 %v964
      %1026 = vmatprep.subr.mxu0 %v968
      %1027 = vmatpush1.msra.mxu0 %v967
      %1028 = vmatprep.subr.mxu0 %v971
      %1029 = vmatpush1.msra.mxu0 %v970
      %1030 = vmatprep.subr.mxu0 %v974
      %1031 = vmatpush1.msra.mxu0 %v973
      %1032 = vmatprep.subr.mxu0 %v977
      %1033 = vmatpush1.msra.mxu0 %v976
      %1034 = vmatprep.subr.mxu0 %v980
      %1035 = vmatpush1.msra.mxu0 %v979
      %1036 = vmatprep.subr.mxu0 0.0
      %1037 = vmatpush1.msra.mxu0 0.0
      %1038 = vmatprep.subr.mxu0 0.0
      %1039 = vmatpush1.msra.mxu0 0.0
      %1040 = vmatprep.subr.mxu0 0.0
      %1041 = vmatpush1.msra.mxu0 0.0
      %1042 = vmatprep.subr.mxu0 0.0
      %1043 = vmatpush1.msra.mxu0 0.0
      %1044 = vmatprep.subr.mxu0 0.0
      %1045 = vmatpush1.msra.mxu0 0.0
      %1046 = vmatprep.subr.mxu0 0.0
      %1047 = vmatpush1.msra.mxu0 0.0
      %1048 = vmatprep.subr.mxu0 0.0
      %1049 = vmatpush1.msra.mxu0 0.0
      %1050 = vmatprep.mubr.f32.mxu0 %v984
      %1051 = vmatmul.mubr.f32.gmra.mrb[0].mxu0 %v905
      %v1052 = vpop.f32.mrb[0].mxu0
      %v1053 = vadd.f32 0.0, %v1052
      %v1054 = vpop.f32.mrb[0].mxu0
      %v1055 = vadd.f32 0.0, %v1054
      %1056 = vdwg.mxu0
      %1057 = vmatprep.subr.mxu0 0.0
      %1058 = vmatpush1.msra.mxu0 %v909
      %1059 = vmatprep.subr.mxu0 0.0
      %1060 = vmatpush1.msra.mxu0 %v912
      %1061 = vmatprep.subr.mxu0 0.0
      %1062 = vmatpush1.msra.mxu0 %v915
      %1063 = vmatprep.subr.mxu0 0.0
      %1064 = vmatpush1.msra.mxu0 %v918
      %1065 = vmatprep.subr.mxu0 0.0
      %1066 = vmatpush1.msra.mxu0 %v921
      %1067 = vmatprep.subr.mxu0 0.0
      %1068 = vmatpush1.msra.mxu0 %v924
      %1069 = vmatprep.subr.mxu0 0.0
      %1070 = vmatpush1.msra.mxu0 %v927
      %1071 = vmatprep.subr.mxu0 0.0
      %1072 = vmatpush1.msra.mxu0 %v930
      %1073 = vmatprep.subr.mxu0 0.0
      %1074 = vmatpush1.msra.mxu0 %v933
      %1075 = vmatprep.subr.mxu0 0.0
      %1076 = vmatpush1.msra.mxu0 %v936
      %1077 = vmatprep.subr.mxu0 0.0
      %1078 = vmatpush1.msra.mxu0 %v939
      %1079 = vmatprep.subr.mxu0 0.0
      %1080 = vmatpush1.msra.mxu0 %v942
      %1081 = vmatprep.subr.mxu0 0.0
      %1082 = vmatpush1.msra.mxu0 %v945
      %1083 = vmatprep.subr.mxu0 0.0
      %1084 = vmatpush1.msra.mxu0 %v948
      %1085 = vmatprep.subr.mxu0 0.0
      %1086 = vmatpush1.msra.mxu0 %v951
      %1087 = vmatprep.subr.mxu0 0.0
      %1088 = vmatpush1.msra.mxu0 %v954
      %1089 = vmatprep.subr.mxu0 0.0
      %1090 = vmatpush1.msra.mxu0 %v957
      %1091 = vmatprep.subr.mxu0 0.0
      %1092 = vmatpush1.msra.mxu0 %v960
      %1093 = vmatprep.subr.mxu0 0.0
      %1094 = vmatpush1.msra.mxu0 %v963
      %1095 = vmatprep.subr.mxu0 0.0
      %1096 = vmatpush1.msra.mxu0 %v966
      %1097 = vmatprep.subr.mxu0 0.0
      %1098 = vmatpush1.msra.mxu0 %v969
      %1099 = vmatprep.subr.mxu0 0.0
      %1100 = vmatpush1.msra.mxu0 %v972
      %1101 = vmatprep.subr.mxu0 0.0
      %1102 = vmatpush1.msra.mxu0 %v975
      %1103 = vmatprep.subr.mxu0 0.0
      %1104 = vmatpush1.msra.mxu0 %v978
      %1105 = vmatprep.subr.mxu0 0.0
      %1106 = vmatpush1.msra.mxu0 %v981
      %1107 = vmatprep.subr.mxu0 0.0
      %1108 = vmatpush1.msra.mxu0 0.0
      %1109 = vmatprep.subr.mxu0 0.0
      %1110 = vmatpush1.msra.mxu0 0.0
      %1111 = vmatprep.subr.mxu0 0.0
      %1112 = vmatpush1.msra.mxu0 0.0
      %1113 = vmatprep.subr.mxu0 0.0
      %1114 = vmatpush1.msra.mxu0 0.0
      %1115 = vmatprep.subr.mxu0 0.0
      %1116 = vmatpush1.msra.mxu0 0.0
      %1117 = vmatprep.subr.mxu0 0.0
      %1118 = vmatpush1.msra.mxu0 0.0
      %1119 = vmatprep.subr.mxu0 0.0
      %1120 = vmatpush1.msra.mxu0 0.0
      %1121 = vmatprep.mubr.f32.mxu0 %v984
      %1122 = vmatmul.mubr.f32.gmra.mrb[0].mxu0 %v905
      %v1123 = vpop.f32.mrb[0].mxu0
      %v1124 = vadd.f32 0.0, %v1123
      %v1125 = vpop.f32.mrb[0].mxu0
      %1126 = vdwg.mxu0
      %v1127 = vld [vmem:[%s2] sm:$0xff]
      %1129 = vset.pattern.permute.xlu0 0
      %1130 = vperm.xlu0 %1129, %v1127
      %v1131 = vpop.permute.xlu0 %1130
      %v1133 = vmul.f32 %v1053, %v1131
      %v1134 = vmul.f32 %v1055, %v1131
      %v1135 = vmul.f32 %v1124, %v1131
      %v1136 = vld [vmem:[%s3] sm:$0xff]
      %1138 = vset.pattern.permute.xlu0 0
      %1139 = vperm.xlu0 %1138, %v1136
      %v1140 = vpop.permute.xlu0 %1139
      %v1142 = vadd.f32 %v1133, %v1140
      %v1143 = vadd.f32 %v1134, %v1140
      %v1144 = vadd.f32 %v1135, %v1140
      %v1145 = vmax.f32 %v1142, 0.0
      %v1146 = vmax.f32 %v1143, 0.0
      %v1147 = vmax.f32 %v1144, 0.0
      %v1148 = vld [vmem:[%s6] sm:$0x7]
      %v1150 = vlaneseq
      %v1151 = vshrl.u32 %v1150, 7
      %v1152 = vsub.s32 0, %v1151
      %v1153 = vrot.slane %v1148, %v1152
      %v1154 = vlaneseq
      %v1155 = vshrl.u32 %v1154, 7
      %v1156 = vsub.s32 1, %v1155
      %v1157 = vrot.slane %v1148, %v1156
      %v1158 = vlaneseq
      %v1159 = vshrl.u32 %v1158, 7
      %v1160 = vsub.s32 2, %v1159
      %v1161 = vrot.slane %v1148, %v1160
      %v1165 = vmul.f32 %v1145, %v1153
      %v1166 = vmul.f32 %v1146, %v1157
      %v1167 = vmul.f32 %v1147, %v1161
      %1168 = vst [vmem:[%s300] sm:$0xff] %v1165
      %1169 = vst [vmem:[%s300 + $0x8] sm:$0xff] %v1166
      %1170 = vst.msk [vmem:[%s300 + $0x10] sm:$0xff] %vm376, %v1167
      %s1171 = smul.u32 3, %s23
      %p1172 = scmp.lt.s32.totalorder %s22, 1
      %s1173 = scalar_select %p1172, %s22, 1
      %p1174 = scmp.lt.s32.totalorder %s1171, 2
      %s1175 = scalar_select %p1174, %s1171, 2
      %s1176 = smul.addr %s1173, 3
      %s1177 = sadd.s32 %s1175, %s1176
      %s1178 = smul.addr %s1177, 8
      %s1179 = scalar_lea.vmem %s7, %s1178
      // Predicated region
      $region49: #{inconv_fwd.2} parent=47 // pred_check
        %p1180 = pneg %p202
      $region50: #{inconv_fwd.2} parent=47 // pred_check_branch
        %1182 = sbr.rel (%p1180) target = $region52
      $region51: #{inconv_fwd.2} parent=47 // pred_region
        %s1183 = smul.u32 3, %s23
      $region52: #{inconv_fwd.2} parent=47 // pred_fallthru
        _
    $region48: #{inconv_fwd.2} parent=5 // pred_fallthru
      _
    %p1184 = scmp.le.s32.totalorder 2, %s13
    // Predicated region
    $region53: #{inconv_fwd.2} parent=5 // pred_check
      %p1185 = pneg %p1184
    $region54: #{inconv_fwd.2} parent=5 // pred_check_branch
      %1187 = sbr.rel (%p1185) target = $region56
    $region55: #{inconv_fwd.2} parent=5 // pred_region
      %s1188 = ssub.s32 %s13, 2
      // Predicated region
      $region57: #{inconv_fwd.2} parent=55 // pred_check
        %p1189 = pneg %p208
      $region58: #{inconv_fwd.2} parent=55 // pred_check_branch
        %1191 = sbr.rel (%p1189) target = $region60
      $region59: #{inconv_fwd.2} parent=55 // pred_region
        %s1192 = smul.u32 3, %s25
        %p1193 = scmp.lt.s32.totalorder %s24, 1
        %s1194 = scalar_select %p1193, %s24, 1
        %p1195 = scmp.lt.s32.totalorder %s1192, 2
        %s1196 = scalar_select %p1195, %s1192, 2
        %s1197 = smul.addr %s1194, 3
        %s1198 = sadd.s32 %s1196, %s1197
        %s1199 = smul.addr %s1198, 8
        %s1200 = scalar_lea.vmem %s7, %s1199
      $region60: #{inconv_fwd.2} parent=55 // pred_fallthru
        _
    $region56: #{inconv_fwd.2} parent=5 // pred_fallthru
      _
  $region6: #{inconv_fwd.2} parent=0 // loop_footer
    %s17 = sadd.s32 1, %s13
  $region7: #{inconv_fwd.2} parent=0 // loop_footer_branch
    %12 = sbr.rel target = $region3
  $region8: #{inconv_fwd.2} parent=0 // loop_exit
    _

</llo_original>
